<compile_context>
chip_gen: v7x
topology: tpu7x:2x2x1
jax: 0.10.0
libtpu: 0.0.40
codegen_flags: <defaults>
</compile_context>

<pallas_src>
import jax
import jax.numpy as jnp
from jax.experimental import pallas as pl
from jax.experimental.pallas import tpu as pltpu


def _make_fse_kernel(n_groups, inv_hw):
    """Kernel factory for a fixed number of channel groups."""

    def kernel(*refs):
        # refs: feats[0..G-1], w1[0..G-1], w2t[0..G-1], cw[0..G-1], cb, out
        feat_refs = refs[0:n_groups]                     # (1, Cg, HW) native dtype
        w1_refs = refs[n_groups:2 * n_groups]            # (Cr, Cg) f32
        w2t_refs = refs[2 * n_groups:3 * n_groups]       # (Cr, Cg) f32
        cw_refs = refs[3 * n_groups:4 * n_groups]        # (Cout, Cg) f32
        cb_ref = refs[4 * n_groups]                      # (Cout, 1) f32
        out_ref = refs[4 * n_groups + 1]                 # (1, Cout, HW)

        # ---- Squeeze: global average pool (f32 accumulate) + fc1 partials ----
        feats = []
        h = None
        for g in range(n_groups):
            f = feat_refs[g][0]                                          # (Cg, HW)
            feats.append(f)
            y_g = jnp.sum(f.astype(jnp.float32), axis=-1, keepdims=True) * inv_hw
            p = jnp.dot(w1_refs[g][...], y_g,
                        preferred_element_type=jnp.float32)              # (Cr, 1)
            h = p if h is None else h + p
        h = jnp.maximum(h, 0.0)                                          # (Cr, 1)

        # ---- Excite (fc2 = VPU mul + sublane reduce) + gate-folded conv ----
        acc = None
        for g in range(n_groups):
            # s_g[0, c] = sigmoid(sum_r w2[c, r] * h[r]) computed as a
            # sublane reduce of (Cr, Cg) -> (1, Cg): no transpose, no MXU.
            s_g = jax.nn.sigmoid(
                jnp.sum(w2t_refs[g][...] * h, axis=0, keepdims=True))    # (1, Cg)
            # Fold the per-channel gate into the 1x1-conv weight columns.
            w_eff = (cw_refs[g][...] * s_g).astype(feats[g].dtype)       # (Cout, Cg)
            p = jnp.dot(w_eff, feats[g],
                        preferred_element_type=jnp.float32)              # (Cout, HW)
            acc = p if acc is None else acc + p
        acc = acc + cb_ref[...]
        out_ref[0] = jnp.maximum(acc, 0.0).astype(out_ref.dtype)

    return kernel


def fse_module(high_features, low_features_list, w1, w2, conv_w, conv_b):
    """fSEModule.forward.

    high_features: (N, Ch, H/2, W/2)
    low_features_list: list of (N, Cl_i, H, W)
    w1: (C//16, C)    = fc[0].weight      (C = Ch + sum(Cl_i))
    w2: (C, C//16)    = fc[2].weight
    conv_w: (Cout, C) = conv_se.weight.reshape(Cout, C)
    conv_b: (Cout,)   = conv_se.bias
    """
    # Nearest-2x upsample of the high branch (pure data movement -> XLA copy).
    # TODO(synk): fold the upsample into the kernel via the 1x1-conv / nearest-2x
    # commute (run the high partial conv at H/2 x W/2, upsample only the
    # writeback) to remove one more HBM pass over the high-feature slab.
    up = jnp.repeat(jnp.repeat(high_features, 2, axis=2), 2, axis=3)
    groups = [up] + list(low_features_list)

    N, _, H, W = up.shape
    HW = H * W
    ch = [int(g.shape[1]) for g in groups]
    C = sum(ch)
    Cout = int(conv_w.shape[0])
    G = len(groups)
    dtype = jnp.result_type(*[g.dtype for g in groups])

    # Lane-dense layout: spatial flattened to last axis, zero-padded to 128.
    HW_pad = ((HW + 127) // 128) * 128
    feats = []
    for g in groups:
        f = g.astype(dtype).reshape(N, g.shape[1], HW)
        if HW_pad != HW:
            f = jnp.pad(f, ((0, 0), (0, 0), (0, HW_pad - HW)))
        feats.append(f)

    # Per-group weight column slices (pool / fc1 / 1x1 conv are linear in the
    # concatenated channel axis, so group-wise partial sums are exact).
    offs = [0]
    for c in ch:
        offs.append(offs[-1] + c)
    w1f = w1.astype(jnp.float32)
    w2tf = w2.astype(jnp.float32).T                   # (Cr, C)
    cwf = conv_w.astype(jnp.float32)
    w1_g = [w1f[:, offs[g]:offs[g + 1]] for g in range(G)]
    w2t_g = [w2tf[:, offs[g]:offs[g + 1]] for g in range(G)]
    cw_g = [cwf[:, offs[g]:offs[g + 1]] for g in range(G)]
    cb2 = conv_b.astype(jnp.float32).reshape(Cout, 1)

    feat_specs = [pl.BlockSpec((1, c, HW_pad), lambda n: (n, 0, 0)) for c in ch]

    def wspec(a):
        return pl.BlockSpec(a.shape, lambda n: (0, 0))

    # Explicit VMEM budget: double-buffered feature + output blocks, capped so
    # it stays within v7x's 64 MiB physical for realistic shapes.
    itemsize = jnp.dtype(dtype).itemsize
    slab_bytes = (C + Cout) * HW_pad * itemsize
    vmem_limit = int(min(max(3 * slab_bytes + (8 << 20), 32 << 20), 100 << 20))

    out = pl.pallas_call(
        _make_fse_kernel(G, 1.0 / HW),
        out_shape=jax.ShapeDtypeStruct((N, Cout, HW_pad), dtype),
        grid=(N,),
        in_specs=(feat_specs
                  + [wspec(a) for a in w1_g]
                  + [wspec(a) for a in w2t_g]
                  + [wspec(a) for a in cw_g]
                  + [wspec(cb2)]),
        out_specs=pl.BlockSpec((1, Cout, HW_pad), lambda n: (n, 0, 0)),
        compiler_params=pltpu.CompilerParams(
            dimension_semantics=("parallel",),
            vmem_limit_bytes=vmem_limit,
        ),
    )(*feats, *w1_g, *w2t_g, *cw_g, cb2)

    if HW_pad != HW:
        out = out[:, :, :HW]
    return out.reshape(N, Cout, H, W)


def _ref_fse(high, lows, w1, w2, cw, cb):
    """Pure-JAX reference matching the PyTorch module."""
    up = jnp.repeat(jnp.repeat(high, 2, axis=2), 2, axis=3)
    feats = jnp.concatenate([up] + list(lows), axis=1)
    y = feats.mean(axis=(2, 3))                                  # (N, C)
    h = jnp.maximum(y @ w1.T, 0.0)                               # (N, Cr)
    s = jax.nn.sigmoid(h @ w2.T)                                 # (N, C)
    scaled = feats * s[:, :, None, None]
    conv = jnp.einsum("oc,nchw->nohw", cw, scaled) + cb[None, :, None, None]
    return jnp.maximum(conv, 0.0)


if __name__ == "__main__":
    key = jax.random.PRNGKey(0)
    k = jax.random.split(key, 8)

    # Small shapes consistent with the module (reduction=16 needs C >= 16).
    N = 2
    Ch = 16                     # high-feature channels
    Cl1, Cl2 = 16, 8            # two low-feature groups
    H, W = 16, 16               # low / output spatial (high is H/2 x W/2)
    C = Ch + Cl1 + Cl2          # in_channel = 40
    Cr = C // 16                # SE hidden = 2
    Cout = Ch                   # default output_channel = high channels

    high = jax.random.normal(k[0], (N, Ch, H // 2, W // 2), dtype=jnp.float32)
    low1 = jax.random.normal(k[1], (N, Cl1, H, W), dtype=jnp.float32)
    low2 = jax.random.normal(k[2], (N, Cl2, H, W), dtype=jnp.float32)
    w1 = jax.random.normal(k[3], (Cr, C), dtype=jnp.float32) * 0.1
    w2 = jax.random.normal(k[4], (C, Cr), dtype=jnp.float32) * 0.1
    conv_w = jax.random.normal(k[5], (Cout, C), dtype=jnp.float32) * 0.1
    conv_b = jax.random.normal(k[6], (Cout,), dtype=jnp.float32) * 0.1

    out = jax.block_until_ready(
        fse_module(high, [low1, low2], w1, w2, conv_w, conv_b))
    ref = jax.block_until_ready(
        _ref_fse(high, [low1, low2], w1, w2, conv_w, conv_b))

    assert out.shape == ref.shape, (out.shape, ref.shape)
    err = float(jnp.max(jnp.abs(out - ref)))
    assert jnp.allclose(out, ref, rtol=1e-4, atol=1e-4), err

    print("KERNEL_OK")
</pallas_src>

<mosaic_0001>
module attributes {stable_mosaic.version = 11 : i64} {
  func.func @kernel(%arg0: i32, %arg1: memref<1x16x256xf32, #tpu.memory_space<vmem>>, %arg2: memref<1x16x256xf32, #tpu.memory_space<vmem>>, %arg3: memref<1x8x256xf32, #tpu.memory_space<vmem>>, %arg4: memref<2x16xf32, #tpu.memory_space<vmem>>, %arg5: memref<2x16xf32, #tpu.memory_space<vmem>>, %arg6: memref<2x8xf32, #tpu.memory_space<vmem>>, %arg7: memref<2x16xf32, #tpu.memory_space<vmem>>, %arg8: memref<2x16xf32, #tpu.memory_space<vmem>>, %arg9: memref<2x8xf32, #tpu.memory_space<vmem>>, %arg10: memref<16x16xf32, #tpu.memory_space<vmem>>, %arg11: memref<16x16xf32, #tpu.memory_space<vmem>>, %arg12: memref<16x8xf32, #tpu.memory_space<vmem>>, %arg13: memref<16x1xf32, #tpu.memory_space<vmem>>, %arg14: memref<1x16x256xf32, #tpu.memory_space<vmem>>) attributes {dimension_semantics = [#tpu.dimension_semantics<parallel>], iteration_bounds = array<i64: 2>, scalar_prefetch = 0 : i64, scratch_operands = 0 : i64, tpu.core_type = #tpu.core_type<tc>, window_params = [{transform_indices = @transform_0, window_bounds = array<i64: 1, 16, 256>}, {transform_indices = @transform_1, window_bounds = array<i64: 1, 16, 256>}, {transform_indices = @transform_2, window_bounds = array<i64: 1, 8, 256>}, {pipeline_mode = #tpu.pipeline_mode<synchronous>, transform_indices = @transform_3, window_bounds = array<i64: 2, 16>}, {pipeline_mode = #tpu.pipeline_mode<synchronous>, transform_indices = @transform_4, window_bounds = array<i64: 2, 16>}, {pipeline_mode = #tpu.pipeline_mode<synchronous>, transform_indices = @transform_5, window_bounds = array<i64: 2, 8>}, {pipeline_mode = #tpu.pipeline_mode<synchronous>, transform_indices = @transform_6, window_bounds = array<i64: 2, 16>}, {pipeline_mode = #tpu.pipeline_mode<synchronous>, transform_indices = @transform_7, window_bounds = array<i64: 2, 16>}, {pipeline_mode = #tpu.pipeline_mode<synchronous>, transform_indices = @transform_8, window_bounds = array<i64: 2, 8>}, {pipeline_mode = #tpu.pipeline_mode<synchronous>, transform_indices = @transform_9, window_bounds = array<i64: 16, 16>}, {pipeline_mode = #tpu.pipeline_mode<synchronous>, transform_indices = @transform_10, window_bounds = array<i64: 16, 16>}, {pipeline_mode = #tpu.pipeline_mode<synchronous>, transform_indices = @transform_11, window_bounds = array<i64: 16, 8>}, {pipeline_mode = #tpu.pipeline_mode<synchronous>, transform_indices = @transform_12, window_bounds = array<i64: 16, 1>}, {transform_indices = @transform_13, window_bounds = array<i64: 1, 16, 256>}]} {
    %c0 = arith.constant 0 : index
    %c0_0 = arith.constant 0 : index
    %c0_1 = arith.constant 0 : index
    %0 = vector.load %arg1[%c0, %c0_0, %c0_1] : memref<1x16x256xf32, #tpu.memory_space<vmem>>, vector<1x16x256xf32>
    %1 = vector.shape_cast %0 : vector<1x16x256xf32> to vector<16x256xf32>
    %cst = arith.constant dense<0.000000e+00> : vector<16xf32>
    %2 = vector.multi_reduction <add>, %1, %cst [1] : vector<16x256xf32> to vector<16xf32>
    %3 = vector.shape_cast %2 : vector<16xf32> to vector<16x1xf32>
    %cst_2 = arith.constant 3.906250e-03 : f32
    %4 = vector.broadcast %cst_2 : f32 to vector<16x1xf32>
    %5 = arith.mulf %3, %4 : vector<16x1xf32>
    %c0_3 = arith.constant 0 : index
    %c0_4 = arith.constant 0 : index
    %6 = vector.load %arg4[%c0_3, %c0_4] : memref<2x16xf32, #tpu.memory_space<vmem>>, vector<2x16xf32>
    %cst_5 = arith.constant dense<0.000000e+00> : vector<2x1xf32>
    %7 = tpu.matmul %6, %5, %cst_5 {dimension_numbers = #tpu.dot_dimension_numbers<[1], [0], [0], [1], [0, 0, 1, 1], [], []>} : vector<2x16xf32>, vector<16x1xf32>, vector<2x1xf32> -> vector<2x1xf32>
    %c0_6 = arith.constant 0 : index
    %c0_7 = arith.constant 0 : index
    %c0_8 = arith.constant 0 : index
    %8 = vector.load %arg2[%c0_6, %c0_7, %c0_8] : memref<1x16x256xf32, #tpu.memory_space<vmem>>, vector<1x16x256xf32>
    %9 = vector.shape_cast %8 : vector<1x16x256xf32> to vector<16x256xf32>
    %cst_9 = arith.constant dense<0.000000e+00> : vector<16xf32>
    %10 = vector.multi_reduction <add>, %9, %cst_9 [1] : vector<16x256xf32> to vector<16xf32>
    %11 = vector.shape_cast %10 : vector<16xf32> to vector<16x1xf32>
    %cst_10 = arith.constant 3.906250e-03 : f32
    %12 = vector.broadcast %cst_10 : f32 to vector<16x1xf32>
    %13 = arith.mulf %11, %12 : vector<16x1xf32>
    %c0_11 = arith.constant 0 : index
    %c0_12 = arith.constant 0 : index
    %14 = vector.load %arg5[%c0_11, %c0_12] : memref<2x16xf32, #tpu.memory_space<vmem>>, vector<2x16xf32>
    %cst_13 = arith.constant dense<0.000000e+00> : vector<2x1xf32>
    %15 = tpu.matmul %14, %13, %cst_13 {dimension_numbers = #tpu.dot_dimension_numbers<[1], [0], [0], [1], [0, 0, 1, 1], [], []>} : vector<2x16xf32>, vector<16x1xf32>, vector<2x1xf32> -> vector<2x1xf32>
    %16 = arith.addf %7, %15 : vector<2x1xf32>
    %c0_14 = arith.constant 0 : index
    %c0_15 = arith.constant 0 : index
    %c0_16 = arith.constant 0 : index
    %17 = vector.load %arg3[%c0_14, %c0_15, %c0_16] : memref<1x8x256xf32, #tpu.memory_space<vmem>>, vector<1x8x256xf32>
    %18 = vector.shape_cast %17 : vector<1x8x256xf32> to vector<8x256xf32>
    %cst_17 = arith.constant dense<0.000000e+00> : vector<8xf32>
    %19 = vector.multi_reduction <add>, %18, %cst_17 [1] : vector<8x256xf32> to vector<8xf32>
    %20 = vector.shape_cast %19 : vector<8xf32> to vector<8x1xf32>
    %cst_18 = arith.constant 3.906250e-03 : f32
    %21 = vector.broadcast %cst_18 : f32 to vector<8x1xf32>
    %22 = arith.mulf %20, %21 : vector<8x1xf32>
    %c0_19 = arith.constant 0 : index
    %c0_20 = arith.constant 0 : index
    %23 = vector.load %arg6[%c0_19, %c0_20] : memref<2x8xf32, #tpu.memory_space<vmem>>, vector<2x8xf32>
    %cst_21 = arith.constant dense<0.000000e+00> : vector<2x1xf32>
    %24 = tpu.matmul %23, %22, %cst_21 {dimension_numbers = #tpu.dot_dimension_numbers<[1], [0], [0], [1], [0, 0, 1, 1], [], []>} : vector<2x8xf32>, vector<8x1xf32>, vector<2x1xf32> -> vector<2x1xf32>
    %25 = arith.addf %16, %24 : vector<2x1xf32>
    %cst_22 = arith.constant 0.000000e+00 : f32
    %26 = vector.broadcast %cst_22 : f32 to vector<2x1xf32>
    %27 = arith.maximumf %25, %26 : vector<2x1xf32>
    %c0_23 = arith.constant 0 : index
    %c0_24 = arith.constant 0 : index
    %28 = vector.load %arg7[%c0_23, %c0_24] : memref<2x16xf32, #tpu.memory_space<vmem>>, vector<2x16xf32>
    %29 = vector.broadcast %27 : vector<2x1xf32> to vector<2x16xf32>
    %30 = arith.mulf %28, %29 : vector<2x16xf32>
    %cst_25 = arith.constant dense<0.000000e+00> : vector<16xf32>
    %31 = vector.multi_reduction <add>, %30, %cst_25 [0] : vector<2x16xf32> to vector<16xf32>
    %32 = vector.shape_cast %31 : vector<16xf32> to vector<1x16xf32>
    %33 = arith.negf %32 : vector<1x16xf32>
    %34 = math.exp %33 : vector<1x16xf32>
    %cst_26 = arith.constant 1.000000e+00 : f32
    %35 = vector.broadcast %cst_26 : f32 to vector<1x16xf32>
    %36 = arith.addf %35, %34 : vector<1x16xf32>
    %37 = arith.divf %35, %36 : vector<1x16xf32>
    %c0_27 = arith.constant 0 : index
    %c0_28 = arith.constant 0 : index
    %38 = vector.load %arg10[%c0_27, %c0_28] : memref<16x16xf32, #tpu.memory_space<vmem>>, vector<16x16xf32>
    %39 = vector.broadcast %37 : vector<1x16xf32> to vector<16x16xf32>
    %40 = arith.mulf %38, %39 : vector<16x16xf32>
    %cst_29 = arith.constant dense<0.000000e+00> : vector<16x256xf32>
    %41 = tpu.matmul %40, %1, %cst_29 {dimension_numbers = #tpu.dot_dimension_numbers<[1], [0], [0], [1], [0, 0, 1, 1], [], []>} : vector<16x16xf32>, vector<16x256xf32>, vector<16x256xf32> -> vector<16x256xf32>
    %c0_30 = arith.constant 0 : index
    %c0_31 = arith.constant 0 : index
    %42 = vector.load %arg8[%c0_30, %c0_31] : memref<2x16xf32, #tpu.memory_space<vmem>>, vector<2x16xf32>
    %43 = vector.broadcast %27 : vector<2x1xf32> to vector<2x16xf32>
    %44 = arith.mulf %42, %43 : vector<2x16xf32>
    %cst_32 = arith.constant dense<0.000000e+00> : vector<16xf32>
    %45 = vector.multi_reduction <add>, %44, %cst_32 [0] : vector<2x16xf32> to vector<16xf32>
    %46 = vector.shape_cast %45 : vector<16xf32> to vector<1x16xf32>
    %47 = arith.negf %46 : vector<1x16xf32>
    %48 = math.exp %47 : vector<1x16xf32>
    %cst_33 = arith.constant 1.000000e+00 : f32
    %49 = vector.broadcast %cst_33 : f32 to vector<1x16xf32>
    %50 = arith.addf %49, %48 : vector<1x16xf32>
    %51 = arith.divf %49, %50 : vector<1x16xf32>
    %c0_34 = arith.constant 0 : index
    %c0_35 = arith.constant 0 : index
    %52 = vector.load %arg11[%c0_34, %c0_35] : memref<16x16xf32, #tpu.memory_space<vmem>>, vector<16x16xf32>
    %53 = vector.broadcast %51 : vector<1x16xf32> to vector<16x16xf32>
    %54 = arith.mulf %52, %53 : vector<16x16xf32>
    %cst_36 = arith.constant dense<0.000000e+00> : vector<16x256xf32>
    %55 = tpu.matmul %54, %9, %cst_36 {dimension_numbers = #tpu.dot_dimension_numbers<[1], [0], [0], [1], [0, 0, 1, 1], [], []>} : vector<16x16xf32>, vector<16x256xf32>, vector<16x256xf32> -> vector<16x256xf32>
    %56 = arith.addf %41, %55 : vector<16x256xf32>
    %c0_37 = arith.constant 0 : index
    %c0_38 = arith.constant 0 : index
    %57 = vector.load %arg9[%c0_37, %c0_38] : memref<2x8xf32, #tpu.memory_space<vmem>>, vector<2x8xf32>
    %58 = vector.broadcast %27 : vector<2x1xf32> to vector<2x8xf32>
    %59 = arith.mulf %57, %58 : vector<2x8xf32>
    %cst_39 = arith.constant dense<0.000000e+00> : vector<8xf32>
    %60 = vector.multi_reduction <add>, %59, %cst_39 [0] : vector<2x8xf32> to vector<8xf32>
    %61 = vector.shape_cast %60 : vector<8xf32> to vector<1x8xf32>
    %62 = arith.negf %61 : vector<1x8xf32>
    %63 = math.exp %62 : vector<1x8xf32>
    %cst_40 = arith.constant 1.000000e+00 : f32
    %64 = vector.broadcast %cst_40 : f32 to vector<1x8xf32>
    %65 = arith.addf %64, %63 : vector<1x8xf32>
    %66 = arith.divf %64, %65 : vector<1x8xf32>
    %c0_41 = arith.constant 0 : index
    %c0_42 = arith.constant 0 : index
    %67 = vector.load %arg12[%c0_41, %c0_42] : memref<16x8xf32, #tpu.memory_space<vmem>>, vector<16x8xf32>
    %68 = vector.broadcast %66 : vector<1x8xf32> to vector<16x8xf32>
    %69 = arith.mulf %67, %68 : vector<16x8xf32>
    %cst_43 = arith.constant dense<0.000000e+00> : vector<16x256xf32>
    %70 = tpu.matmul %69, %18, %cst_43 {dimension_numbers = #tpu.dot_dimension_numbers<[1], [0], [0], [1], [0, 0, 1, 1], [], []>} : vector<16x8xf32>, vector<8x256xf32>, vector<16x256xf32> -> vector<16x256xf32>
    %71 = arith.addf %56, %70 : vector<16x256xf32>
    %c0_44 = arith.constant 0 : index
    %c0_45 = arith.constant 0 : index
    %72 = vector.load %arg13[%c0_44, %c0_45] : memref<16x1xf32, #tpu.memory_space<vmem>>, vector<16x1xf32>
    %73 = vector.broadcast %72 : vector<16x1xf32> to vector<16x256xf32>
    %74 = arith.addf %71, %73 : vector<16x256xf32>
    %cst_46 = arith.constant 0.000000e+00 : f32
    %75 = vector.broadcast %cst_46 : f32 to vector<16x256xf32>
    %76 = arith.maximumf %74, %75 : vector<16x256xf32>
    %c0_47 = arith.constant 0 : index
    %c0_48 = arith.constant 0 : index
    %c0_49 = arith.constant 0 : index
    %77 = vector.load %arg14[%c0_47, %c0_48, %c0_49] : memref<1x16x256xf32, #tpu.memory_space<vmem>>, vector<1x16x256xf32>
    %78 = vector.shape_cast %77 : vector<1x16x256xf32> to vector<16x256xf32>
    %79 = vector.shape_cast %76 : vector<16x256xf32> to vector<1x16x256xf32>
    tpu.vector_store %arg14[%c0_47, %c0_48, %c0_49], %79 {strides = array<i32>} : memref<1x16x256xf32, #tpu.memory_space<vmem>>, vector<1x16x256xf32>,
    return
  }
  func.func @transform_0(%arg0: i32) -> (i32, i32, i32) {
    %c0_i32 = arith.constant 0 : i32
    %c0_i32_0 = arith.constant 0 : i32
    %c0_i32_1 = arith.constant 0 : i32
    return %arg0, %c0_i32, %c0_i32_0 : i32, i32, i32
  }
  func.func @transform_1(%arg0: i32) -> (i32, i32, i32) {
    %c0_i32 = arith.constant 0 : i32
    %c0_i32_0 = arith.constant 0 : i32
    %c0_i32_1 = arith.constant 0 : i32
    return %arg0, %c0_i32, %c0_i32_0 : i32, i32, i32
  }
  func.func @transform_2(%arg0: i32) -> (i32, i32, i32) {
    %c0_i32 = arith.constant 0 : i32
    %c0_i32_0 = arith.constant 0 : i32
    %c0_i32_1 = arith.constant 0 : i32
    return %arg0, %c0_i32, %c0_i32_0 : i32, i32, i32
  }
  func.func @transform_3(%arg0: i32) -> (i32, i32) {
    %c0_i32 = arith.constant 0 : i32
    %c0_i32_0 = arith.constant 0 : i32
    %c0_i32_1 = arith.constant 0 : i32
    return %c0_i32, %c0_i32_0 : i32, i32
  }
  func.func @transform_4(%arg0: i32) -> (i32, i32) {
    %c0_i32 = arith.constant 0 : i32
    %c0_i32_0 = arith.constant 0 : i32
    %c0_i32_1 = arith.constant 0 : i32
    return %c0_i32, %c0_i32_0 : i32, i32
  }
  func.func @transform_5(%arg0: i32) -> (i32, i32) {
    %c0_i32 = arith.constant 0 : i32
    %c0_i32_0 = arith.constant 0 : i32
    %c0_i32_1 = arith.constant 0 : i32
    return %c0_i32, %c0_i32_0 : i32, i32
  }
  func.func @transform_6(%arg0: i32) -> (i32, i32) {
    %c0_i32 = arith.constant 0 : i32
    %c0_i32_0 = arith.constant 0 : i32
    %c0_i32_1 = arith.constant 0 : i32
    return %c0_i32, %c0_i32_0 : i32, i32
  }
  func.func @transform_7(%arg0: i32) -> (i32, i32) {
    %c0_i32 = arith.constant 0 : i32
    %c0_i32_0 = arith.constant 0 : i32
    %c0_i32_1 = arith.constant 0 : i32
    return %c0_i32, %c0_i32_0 : i32, i32
  }
  func.func @transform_8(%arg0: i32) -> (i32, i32) {
    %c0_i32 = arith.constant 0 : i32
    %c0_i32_0 = arith.constant 0 : i32
    %c0_i32_1 = arith.constant 0 : i32
    return %c0_i32, %c0_i32_0 : i32, i32
  }
  func.func @transform_9(%arg0: i32) -> (i32, i32) {
    %c0_i32 = arith.constant 0 : i32
    %c0_i32_0 = arith.constant 0 : i32
    %c0_i32_1 = arith.constant 0 : i32
    return %c0_i32, %c0_i32_0 : i32, i32
  }
  func.func @transform_10(%arg0: i32) -> (i32, i32) {
    %c0_i32 = arith.constant 0 : i32
    %c0_i32_0 = arith.constant 0 : i32
    %c0_i32_1 = arith.constant 0 : i32
    return %c0_i32, %c0_i32_0 : i32, i32
  }
  func.func @transform_11(%arg0: i32) -> (i32, i32) {
    %c0_i32 = arith.constant 0 : i32
    %c0_i32_0 = arith.constant 0 : i32
    %c0_i32_1 = arith.constant 0 : i32
    return %c0_i32, %c0_i32_0 : i32, i32
  }
  func.func @transform_12(%arg0: i32) -> (i32, i32) {
    %c0_i32 = arith.constant 0 : i32
    %c0_i32_0 = arith.constant 0 : i32
    %c0_i32_1 = arith.constant 0 : i32
    return %c0_i32, %c0_i32_0 : i32, i32
  }
  func.func @transform_13(%arg0: i32) -> (i32, i32, i32) {
    %c0_i32 = arith.constant 0 : i32
    %c0_i32_0 = arith.constant 0 : i32
    %c0_i32_1 = arith.constant 0 : i32
    return %arg0, %c0_i32, %c0_i32_0 : i32, i32, i32
  }
}

</mosaic_0001>

<llo_original>
// kernel: tpu_custom_call.1
$region0: #{tpu_custom_call.1}
  #allocation0 [shape = 'u32[]', space=smem, size = 0x4, offset = 0x4, fixed_abs, tag = 'smem constant byte address 0x4 - core index']
  #allocation1 [shape = 'u32[144,128]{1,0:T(1,128)}', space=vmem, size = 0x12000, scoped, tag = 'internal scratch']
  %s0 = inlined_call_operand.hbm [shape: f32[2,16,256], index: 0, kind: input, shape index: {}]
  %s1 = inlined_call_operand.hbm [shape: f32[2,16,256], index: 1, kind: input, shape index: {}]
  %s2 = inlined_call_operand.vmem [shape: f32[2,8,256], index: 2, kind: input, shape index: {}]
  %s3 = inlined_call_operand.vmem [shape: f32[2,16], index: 3, kind: input, shape index: {}]
  %s4 = inlined_call_operand.hbm [shape: f32[2,16], index: 4, kind: input, shape index: {}]
  %s5 = inlined_call_operand.hbm [shape: f32[2,8], index: 5, kind: input, shape index: {}]
  %s6 = inlined_call_operand.hbm [shape: f32[2,16], index: 6, kind: input, shape index: {}]
  %s7 = inlined_call_operand.hbm [shape: f32[2,16], index: 7, kind: input, shape index: {}]
  %s8 = inlined_call_operand.hbm [shape: f32[2,8], index: 8, kind: input, shape index: {}]
  %s9 = inlined_call_operand.vmem [shape: f32[16,16], index: 9, kind: input, shape index: {}]
  %s10 = inlined_call_operand.vmem [shape: f32[16,16], index: 10, kind: input, shape index: {}]
  %s11 = inlined_call_operand.vmem [shape: f32[16,8], index: 11, kind: input, shape index: {}]
  %s12 = inlined_call_operand.vmem [shape: f32[16,1], index: 12, kind: input, shape index: {}]
  %s13 = inlined_call_operand.hbm [shape: f32[2,16,256], index: 13, kind: output, shape index: {}]
  %s14 = sld [smem:[#allocation0]]
  $region113: #{tpu_custom_call.1} parent=0
    _
  %s16 = ssub.s32 1, %s14
  %s17 = scalar_select 0, %s16, %s14
  $region1: #{tpu_custom_call.1} parent=0
    #allocation2 [shape = 'u8[32768]{0}', space=vmem, size = 0x8000, scoped, tag = 'input window, operand 0']
    #allocation3 [shape = 's32[2]{0}', space=sflag, size = 0x8, scoped, tag = 'scoped memory for tpu_custom_call.1']
    #allocation4 [shape = 's32[2]{0}', space=sflag, size = 0x8, scoped, tag = 'scoped memory for tpu_custom_call.1']
    #allocation5 [shape = 'u8[32768]{0}', space=vmem, size = 0x8000, scoped, tag = 'input window, operand 1']
    #allocation6 [shape = 's32[2]{0}', space=sflag, size = 0x8, scoped, tag = 'scoped memory for tpu_custom_call.1']
    #allocation7 [shape = 'u8[1024]{0}', space=vmem, size = 0x400, scoped, tag = 'input window, operand 4, single buffered']
    #allocation8 [shape = 'u8[1024]{0}', space=vmem, size = 0x400, scoped, tag = 'input window, operand 5, single buffered']
    #allocation9 [shape = 's32[1]{0}', space=sflag, size = 0x4, scoped, tag = 'scoped memory for tpu_custom_call.1']
    #allocation10 [shape = 'u8[1024]{0}', space=vmem, size = 0x400, scoped, tag = 'input window, operand 6, single buffered']
    #allocation11 [shape = 'u8[1024]{0}', space=vmem, size = 0x400, scoped, tag = 'input window, operand 7, single buffered']
    #allocation12 [shape = 's32[1]{0}', space=sflag, size = 0x4, scoped, tag = 'scoped memory for tpu_custom_call.1']
    #allocation13 [shape = 'u8[1024]{0}', space=vmem, size = 0x400, scoped, tag = 'input window, operand 8, single buffered']
    #allocation14 [shape = 'u8[32768]{0}', space=vmem, size = 0x8000, scoped, tag = 'output window, operand 0']
    %18 = vsyncpa [#allocation3], 0
    %s19 = scalar_lea.sflag [#allocation3], 1
    %20 = vsyncpa %s19, 0
    %21 = vsyncpa [#allocation6], 0
    %s22 = scalar_lea.sflag [#allocation6], 1
    %23 = vsyncpa %s22, 0
    %24 = vsyncpa [#allocation9], 0
    %25 = vsyncpa [#allocation12], 0
    %26 = vsyncpa [#allocation4], 0
    %s27 = scalar_lea.sflag [#allocation4], 1
    %28 = vsyncpa %s27, 0
    loop: start=0, step=1, limit=4
    $region2: #{tpu_custom_call.1} parent=1 // loop_pre_header
      _
    $region3: #{tpu_custom_call.1} parent=1 // loop_header
      %s30 = sphi 0, %s34
      %p31 = scmp.ge.s32.totalorder %s30, 4
      %s40 = sphi 0, %s42
      %s43 = sphi 0, %s40
      %s44 = sphi 0, %s43
      %s60 = sphi 0, %s44
      %s66 = sphi 0, %s68
      %s69 = sphi 0, %s66
      %s70 = sphi 0, %s69
      %s86 = sphi 0, %s70
      %s92 = sphi 0, %s94
      %s95 = sphi 0, %s92
      %s96 = sphi 0, %s95
      %s112 = sphi 0, %s96
      %s116 = sphi 0, %s116
      %s118 = sphi 0, %s116
      %s119 = sphi 0, %s118
      %s133 = sphi 0, %s119
      %s137 = sphi 0, %s137
      %s139 = sphi 0, %s137
      %s140 = sphi 0, %s139
      %s154 = sphi 0, %s140
      %s158 = sphi 0, %s158
      %s160 = sphi 0, %s158
      %s161 = sphi 0, %s160
      %s175 = sphi 0, %s161
      %s179 = sphi 0, %s179
      %s181 = sphi 0, %s179
      %s182 = sphi 0, %s181
      %s196 = sphi 0, %s182
      %s200 = sphi 0, %s200
      %s202 = sphi 0, %s200
      %s203 = sphi 0, %s202
      %s217 = sphi 0, %s203
      %s221 = sphi 0, %s221
      %s223 = sphi 0, %s221
      %s224 = sphi 0, %s223
      %s238 = sphi 0, %s224
      %s242 = sphi 0, %s242
      %s244 = sphi 0, %s242
      %s245 = sphi 0, %s244
      %s259 = sphi 0, %s245
      %s263 = sphi 0, %s263
      %s265 = sphi 0, %s263
      %s266 = sphi 0, %s265
      %s280 = sphi 0, %s266
      %s284 = sphi 0, %s284
      %s286 = sphi 0, %s284
      %s287 = sphi 0, %s286
      %s301 = sphi 0, %s287
      %s305 = sphi 0, %s305
      %s307 = sphi 0, %s305
      %s308 = sphi 0, %s307
      %s322 = sphi 0, %s308
      %s328 = sphi 0, %s330
      %s331 = sphi 0, %s328
      %s332 = sphi 0, %s331
      %s348 = sphi 0, %s332
    $region4: #{tpu_custom_call.1} parent=1 // loop_header_branch
      %33 = sbr.rel (%p31) target = $region8
    $region5: #{tpu_custom_call.1} parent=1 // loop_body
      %s35 = ssub.s32 %s30, 1
      %s36 = ssub.s32 %s30, 2
      %s37 = sadd.s32 %s30, 1
      %s38 = ssub.s32 %s30, %s37
      %p39 = scmp.eq.s32.totalorder %s38, 0
      %s41 = sadd.s32 %s40, 1
      %s42 = scalar_select %p39, %s40, %s41
      %p45 = pneg %p39
      %p46 = scmp.eq.s32.totalorder %s30, 1
      %p47 = por %p45, %p46
      %p48 = scmp.ne.s32.totalorder %s40, %s43
      %p49 = scmp.eq.s32.totalorder %s30, 0
      %p50 = por %p48, %p49
      %p51 = scmp.ne.s32.totalorder %s40, %s43
      %p52 = scmp.eq.s32.totalorder %s35, 1
      %p53 = por %p51, %p52
      %p54 = scmp.ne.s32.totalorder %s43, %s44
      %p55 = scmp.eq.s32.totalorder %s35, 0
      %p56 = por %p54, %p55
      %p57 = scmp.ne.s32.totalorder %s43, %s44
      %p58 = scmp.eq.s32.totalorder %s36, 1
      %p59 = por %p57, %p58
      %p61 = scmp.ne.s32.totalorder %s44, %s60
      %p62 = scmp.eq.s32.totalorder %s36, 0
      %p63 = por %p61, %p62
      %s64 = ssub.s32 %s30, %s37
      %p65 = scmp.eq.s32.totalorder %s64, 0
      %s67 = sadd.s32 %s66, 1
      %s68 = scalar_select %p65, %s66, %s67
      %p71 = pneg %p65
      %p72 = scmp.eq.s32.totalorder %s30, 1
      %p73 = por %p71, %p72
      %p74 = scmp.ne.s32.totalorder %s66, %s69
      %p75 = scmp.eq.s32.totalorder %s30, 0
      %p76 = por %p74, %p75
      %p77 = scmp.ne.s32.totalorder %s66, %s69
      %p78 = scmp.eq.s32.totalorder %s35, 1
      %p79 = por %p77, %p78
      %p80 = scmp.ne.s32.totalorder %s69, %s70
      %p81 = scmp.eq.s32.totalorder %s35, 0
      %p82 = por %p80, %p81
      %p83 = scmp.ne.s32.totalorder %s69, %s70
      %p84 = scmp.eq.s32.totalorder %s36, 1
      %p85 = por %p83, %p84
      %p87 = scmp.ne.s32.totalorder %s70, %s86
      %p88 = scmp.eq.s32.totalorder %s36, 0
      %p89 = por %p87, %p88
      %s90 = ssub.s32 %s30, %s37
      %p91 = scmp.eq.s32.totalorder %s90, 0
      %s93 = sadd.s32 %s92, 1
      %s94 = scalar_select %p91, %s92, %s93
      %p97 = pneg %p91
      %p98 = scmp.eq.s32.totalorder %s30, 1
      %p99 = por %p97, %p98
      %p100 = scmp.ne.s32.totalorder %s92, %s95
      %p101 = scmp.eq.s32.totalorder %s30, 0
      %p102 = por %p100, %p101
      %p103 = scmp.ne.s32.totalorder %s92, %s95
      %p104 = scmp.eq.s32.totalorder %s35, 1
      %p105 = por %p103, %p104
      %p106 = scmp.ne.s32.totalorder %s95, %s96
      %p107 = scmp.eq.s32.totalorder %s35, 0
      %p108 = por %p106, %p107
      %p109 = scmp.ne.s32.totalorder %s95, %s96
      %p110 = scmp.eq.s32.totalorder %s36, 1
      %p111 = por %p109, %p110
      %p113 = scmp.ne.s32.totalorder %s96, %s112
      %p114 = scmp.eq.s32.totalorder %s36, 0
      %p115 = por %p113, %p114
      %s117 = sadd.s32 %s116, 1
      %p120 = scmp.eq.s32.totalorder %s30, 1
      %p121 = scmp.ne.s32.totalorder %s116, %s118
      %p122 = scmp.eq.s32.totalorder %s30, 0
      %p123 = por %p121, %p122
      %p124 = scmp.ne.s32.totalorder %s116, %s118
      %p125 = scmp.eq.s32.totalorder %s35, 1
      %p126 = por %p124, %p125
      %p127 = scmp.ne.s32.totalorder %s118, %s119
      %p128 = scmp.eq.s32.totalorder %s35, 0
      %p129 = por %p127, %p128
      %p130 = scmp.ne.s32.totalorder %s118, %s119
      %p131 = scmp.eq.s32.totalorder %s36, 1
      %p132 = por %p130, %p131
      %p134 = scmp.ne.s32.totalorder %s119, %s133
      %p135 = scmp.eq.s32.totalorder %s36, 0
      %p136 = por %p134, %p135
      %s138 = sadd.s32 %s137, 1
      %p141 = scmp.eq.s32.totalorder %s30, 1
      %p142 = scmp.ne.s32.totalorder %s137, %s139
      %p143 = scmp.eq.s32.totalorder %s30, 0
      %p144 = por %p142, %p143
      %p145 = scmp.ne.s32.totalorder %s137, %s139
      %p146 = scmp.eq.s32.totalorder %s35, 1
      %p147 = por %p145, %p146
      %p148 = scmp.ne.s32.totalorder %s139, %s140
      %p149 = scmp.eq.s32.totalorder %s35, 0
      %p150 = por %p148, %p149
      %p151 = scmp.ne.s32.totalorder %s139, %s140
      %p152 = scmp.eq.s32.totalorder %s36, 1
      %p153 = por %p151, %p152
      %p155 = scmp.ne.s32.totalorder %s140, %s154
      %p156 = scmp.eq.s32.totalorder %s36, 0
      %p157 = por %p155, %p156
      %s159 = sadd.s32 %s158, 1
      %p162 = scmp.eq.s32.totalorder %s30, 1
      %p163 = scmp.ne.s32.totalorder %s158, %s160
      %p164 = scmp.eq.s32.totalorder %s30, 0
      %p165 = por %p163, %p164
      %p166 = scmp.ne.s32.totalorder %s158, %s160
      %p167 = scmp.eq.s32.totalorder %s35, 1
      %p168 = por %p166, %p167
      %p169 = scmp.ne.s32.totalorder %s160, %s161
      %p170 = scmp.eq.s32.totalorder %s35, 0
      %p171 = por %p169, %p170
      %p172 = scmp.ne.s32.totalorder %s160, %s161
      %p173 = scmp.eq.s32.totalorder %s36, 1
      %p174 = por %p172, %p173
      %p176 = scmp.ne.s32.totalorder %s161, %s175
      %p177 = scmp.eq.s32.totalorder %s36, 0
      %p178 = por %p176, %p177
      %s180 = sadd.s32 %s179, 1
      %p183 = scmp.eq.s32.totalorder %s30, 1
      %p184 = scmp.ne.s32.totalorder %s179, %s181
      %p185 = scmp.eq.s32.totalorder %s30, 0
      %p186 = por %p184, %p185
      %p187 = scmp.ne.s32.totalorder %s179, %s181
      %p188 = scmp.eq.s32.totalorder %s35, 1
      %p189 = por %p187, %p188
      %p190 = scmp.ne.s32.totalorder %s181, %s182
      %p191 = scmp.eq.s32.totalorder %s35, 0
      %p192 = por %p190, %p191
      %p193 = scmp.ne.s32.totalorder %s181, %s182
      %p194 = scmp.eq.s32.totalorder %s36, 1
      %p195 = por %p193, %p194
      %p197 = scmp.ne.s32.totalorder %s182, %s196
      %p198 = scmp.eq.s32.totalorder %s36, 0
      %p199 = por %p197, %p198
      %s201 = sadd.s32 %s200, 1
      %p204 = scmp.eq.s32.totalorder %s30, 1
      %p205 = scmp.ne.s32.totalorder %s200, %s202
      %p206 = scmp.eq.s32.totalorder %s30, 0
      %p207 = por %p205, %p206
      %p208 = scmp.ne.s32.totalorder %s200, %s202
      %p209 = scmp.eq.s32.totalorder %s35, 1
      %p210 = por %p208, %p209
      %p211 = scmp.ne.s32.totalorder %s202, %s203
      %p212 = scmp.eq.s32.totalorder %s35, 0
      %p213 = por %p211, %p212
      %p214 = scmp.ne.s32.totalorder %s202, %s203
      %p215 = scmp.eq.s32.totalorder %s36, 1
      %p216 = por %p214, %p215
      %p218 = scmp.ne.s32.totalorder %s203, %s217
      %p219 = scmp.eq.s32.totalorder %s36, 0
      %p220 = por %p218, %p219
      %s222 = sadd.s32 %s221, 1
      %p225 = scmp.eq.s32.totalorder %s30, 1
      %p226 = scmp.ne.s32.totalorder %s221, %s223
      %p227 = scmp.eq.s32.totalorder %s30, 0
      %p228 = por %p226, %p227
      %p229 = scmp.ne.s32.totalorder %s221, %s223
      %p230 = scmp.eq.s32.totalorder %s35, 1
      %p231 = por %p229, %p230
      %p232 = scmp.ne.s32.totalorder %s223, %s224
      %p233 = scmp.eq.s32.totalorder %s35, 0
      %p234 = por %p232, %p233
      %p235 = scmp.ne.s32.totalorder %s223, %s224
      %p236 = scmp.eq.s32.totalorder %s36, 1
      %p237 = por %p235, %p236
      %p239 = scmp.ne.s32.totalorder %s224, %s238
      %p240 = scmp.eq.s32.totalorder %s36, 0
      %p241 = por %p239, %p240
      %s243 = sadd.s32 %s242, 1
      %p246 = scmp.eq.s32.totalorder %s30, 1
      %p247 = scmp.ne.s32.totalorder %s242, %s244
      %p248 = scmp.eq.s32.totalorder %s30, 0
      %p249 = por %p247, %p248
      %p250 = scmp.ne.s32.totalorder %s242, %s244
      %p251 = scmp.eq.s32.totalorder %s35, 1
      %p252 = por %p250, %p251
      %p253 = scmp.ne.s32.totalorder %s244, %s245
      %p254 = scmp.eq.s32.totalorder %s35, 0
      %p255 = por %p253, %p254
      %p256 = scmp.ne.s32.totalorder %s244, %s245
      %p257 = scmp.eq.s32.totalorder %s36, 1
      %p258 = por %p256, %p257
      %p260 = scmp.ne.s32.totalorder %s245, %s259
      %p261 = scmp.eq.s32.totalorder %s36, 0
      %p262 = por %p260, %p261
      %s264 = sadd.s32 %s263, 1
      %p267 = scmp.eq.s32.totalorder %s30, 1
      %p268 = scmp.ne.s32.totalorder %s263, %s265
      %p269 = scmp.eq.s32.totalorder %s30, 0
      %p270 = por %p268, %p269
      %p271 = scmp.ne.s32.totalorder %s263, %s265
      %p272 = scmp.eq.s32.totalorder %s35, 1
      %p273 = por %p271, %p272
      %p274 = scmp.ne.s32.totalorder %s265, %s266
      %p275 = scmp.eq.s32.totalorder %s35, 0
      %p276 = por %p274, %p275
      %p277 = scmp.ne.s32.totalorder %s265, %s266
      %p278 = scmp.eq.s32.totalorder %s36, 1
      %p279 = por %p277, %p278
      %p281 = scmp.ne.s32.totalorder %s266, %s280
      %p282 = scmp.eq.s32.totalorder %s36, 0
      %p283 = por %p281, %p282
      %s285 = sadd.s32 %s284, 1
      %p288 = scmp.eq.s32.totalorder %s30, 1
      %p289 = scmp.ne.s32.totalorder %s284, %s286
      %p290 = scmp.eq.s32.totalorder %s30, 0
      %p291 = por %p289, %p290
      %p292 = scmp.ne.s32.totalorder %s284, %s286
      %p293 = scmp.eq.s32.totalorder %s35, 1
      %p294 = por %p292, %p293
      %p295 = scmp.ne.s32.totalorder %s286, %s287
      %p296 = scmp.eq.s32.totalorder %s35, 0
      %p297 = por %p295, %p296
      %p298 = scmp.ne.s32.totalorder %s286, %s287
      %p299 = scmp.eq.s32.totalorder %s36, 1
      %p300 = por %p298, %p299
      %p302 = scmp.ne.s32.totalorder %s287, %s301
      %p303 = scmp.eq.s32.totalorder %s36, 0
      %p304 = por %p302, %p303
      %s306 = sadd.s32 %s305, 1
      %p309 = scmp.eq.s32.totalorder %s30, 1
      %p310 = scmp.ne.s32.totalorder %s305, %s307
      %p311 = scmp.eq.s32.totalorder %s30, 0
      %p312 = por %p310, %p311
      %p313 = scmp.ne.s32.totalorder %s305, %s307
      %p314 = scmp.eq.s32.totalorder %s35, 1
      %p315 = por %p313, %p314
      %p316 = scmp.ne.s32.totalorder %s307, %s308
      %p317 = scmp.eq.s32.totalorder %s35, 0
      %p318 = por %p316, %p317
      %p319 = scmp.ne.s32.totalorder %s307, %s308
      %p320 = scmp.eq.s32.totalorder %s36, 1
      %p321 = por %p319, %p320
      %p323 = scmp.ne.s32.totalorder %s308, %s322
      %p324 = scmp.eq.s32.totalorder %s36, 0
      %p325 = por %p323, %p324
      %s326 = ssub.s32 %s30, %s37
      %p327 = scmp.eq.s32.totalorder %s326, 0
      %s329 = sadd.s32 %s328, 1
      %s330 = scalar_select %p327, %s328, %s329
      %p333 = pneg %p327
      %p334 = scmp.eq.s32.totalorder %s30, 1
      %p335 = por %p333, %p334
      %p336 = scmp.ne.s32.totalorder %s328, %s331
      %p337 = scmp.eq.s32.totalorder %s30, 0
      %p338 = por %p336, %p337
      %p339 = scmp.ne.s32.totalorder %s328, %s331
      %p340 = scmp.eq.s32.totalorder %s35, 1
      %p341 = por %p339, %p340
      %p342 = scmp.ne.s32.totalorder %s331, %s332
      %p343 = scmp.eq.s32.totalorder %s35, 0
      %p344 = por %p342, %p343
      %p345 = scmp.ne.s32.totalorder %s331, %s332
      %p346 = scmp.eq.s32.totalorder %s36, 1
      %p347 = por %p345, %p346
      %p349 = scmp.ne.s32.totalorder %s332, %s348
      %p350 = scmp.eq.s32.totalorder %s36, 0
      %p351 = por %p349, %p350
      %p352 = scmp.le.s32.totalorder 1, %s30
      %p353 = scmp.lt.s32.totalorder %s30, 3
      %p354 = pnand %p352, %p353
      %p355 = pneg %p354
      // Predicated region
      $region9: #{tpu_custom_call.1} parent=5 // pred_check
        _
      $region10: #{tpu_custom_call.1} parent=5 // pred_check_branch
        %357 = sbr.rel (%p354) target = $region12
      $region11: #{tpu_custom_call.1} parent=5 // pred_region
        %s358 = ssub.s32 %s30, 1
        // Predicated region
        $region13: #{tpu_custom_call.1} parent=11 // pred_check
          %p359 = pneg %p129
        $region14: #{tpu_custom_call.1} parent=11 // pred_check_branch
          %361 = sbr.rel (%p359) target = $region16
        $region15: #{tpu_custom_call.1} parent=11 // pred_region
          _
        $region16: #{tpu_custom_call.1} parent=11 // pred_fallthru
          _
        // Predicated region
        $region17: #{tpu_custom_call.1} parent=11 // pred_check
          %p362 = pneg %p150
        $region18: #{tpu_custom_call.1} parent=11 // pred_check_branch
          %364 = sbr.rel (%p362) target = $region20
        $region19: #{tpu_custom_call.1} parent=11 // pred_region
          %s366 = ssub.s32 32, 32
          %367 = vsyncadd [#allocation6], %s366
          %s369 = sshll.u32 [#allocation7], 4
          %s370 = int_to_ptr.vmem [resolvable:$true] %s369
          %372 = dma.hbm_to_vmem [thread:$0]  %s4, 32, %s370, [#allocation6]
        $region20: #{tpu_custom_call.1} parent=11 // pred_fallthru
          _
        // Predicated region
        $region21: #{tpu_custom_call.1} parent=11 // pred_check
          %p373 = pneg %p171
        $region22: #{tpu_custom_call.1} parent=11 // pred_check_branch
          %375 = sbr.rel (%p373) target = $region24
        $region23: #{tpu_custom_call.1} parent=11 // pred_region
          %s377 = ssub.s32 32, 32
          %378 = vsyncadd [#allocation9], %s377
          %s380 = sshll.u32 [#allocation8], 4
          %s381 = int_to_ptr.vmem [resolvable:$true] %s380
          %383 = dma.hbm_to_vmem [thread:$0]  %s5, 32, %s381, [#allocation9]
        $region24: #{tpu_custom_call.1} parent=11 // pred_fallthru
          _
        // Predicated region
        $region25: #{tpu_custom_call.1} parent=11 // pred_check
          %p384 = pneg %p192
        $region26: #{tpu_custom_call.1} parent=11 // pred_check_branch
          %386 = sbr.rel (%p384) target = $region28
        $region27: #{tpu_custom_call.1} parent=11 // pred_region
          %s388 = ssub.s32 32, 32
          %389 = vsyncadd [#allocation9], %s388
          %s391 = sshll.u32 [#allocation10], 4
          %s392 = int_to_ptr.vmem [resolvable:$true] %s391
          %394 = dma.hbm_to_vmem [thread:$0]  %s6, 32, %s392, [#allocation9]
        $region28: #{tpu_custom_call.1} parent=11 // pred_fallthru
          _
        // Predicated region
        $region29: #{tpu_custom_call.1} parent=11 // pred_check
          %p395 = pneg %p213
        $region30: #{tpu_custom_call.1} parent=11 // pred_check_branch
          %397 = sbr.rel (%p395) target = $region32
        $region31: #{tpu_custom_call.1} parent=11 // pred_region
          %s399 = ssub.s32 32, 32
          %400 = vsyncadd [#allocation12], %s399
          %s402 = sshll.u32 [#allocation11], 4
          %s403 = int_to_ptr.vmem [resolvable:$true] %s402
          %405 = dma.hbm_to_vmem [thread:$0]  %s7, 32, %s403, [#allocation12]
        $region32: #{tpu_custom_call.1} parent=11 // pred_fallthru
          _
        // Predicated region
        $region33: #{tpu_custom_call.1} parent=11 // pred_check
          %p406 = pneg %p234
        $region34: #{tpu_custom_call.1} parent=11 // pred_check_branch
          %408 = sbr.rel (%p406) target = $region36
        $region35: #{tpu_custom_call.1} parent=11 // pred_region
          %s410 = ssub.s32 32, 32
          %411 = vsyncadd [#allocation12], %s410
          %s413 = sshll.u32 [#allocation13], 4
          %s414 = int_to_ptr.vmem [resolvable:$true] %s413
          %416 = dma.hbm_to_vmem [thread:$0]  %s8, 32, %s414, [#allocation12]
        $region36: #{tpu_custom_call.1} parent=11 // pred_fallthru
          _
        // Predicated region
        $region37: #{tpu_custom_call.1} parent=11 // pred_check
          %p417 = pneg %p255
        $region38: #{tpu_custom_call.1} parent=11 // pred_check_branch
          %419 = sbr.rel (%p417) target = $region40
        $region39: #{tpu_custom_call.1} parent=11 // pred_region
          _
        $region40: #{tpu_custom_call.1} parent=11 // pred_fallthru
          _
        // Predicated region
        $region41: #{tpu_custom_call.1} parent=11 // pred_check
          %p420 = pneg %p276
        $region42: #{tpu_custom_call.1} parent=11 // pred_check_branch
          %422 = sbr.rel (%p420) target = $region44
        $region43: #{tpu_custom_call.1} parent=11 // pred_region
          _
        $region44: #{tpu_custom_call.1} parent=11 // pred_fallthru
          _
        // Predicated region
        $region45: #{tpu_custom_call.1} parent=11 // pred_check
          %p423 = pneg %p297
        $region46: #{tpu_custom_call.1} parent=11 // pred_check_branch
          %425 = sbr.rel (%p423) target = $region48
        $region47: #{tpu_custom_call.1} parent=11 // pred_region
          _
        $region48: #{tpu_custom_call.1} parent=11 // pred_fallthru
          _
        // Predicated region
        $region49: #{tpu_custom_call.1} parent=11 // pred_check
          %p426 = pneg %p318
        $region50: #{tpu_custom_call.1} parent=11 // pred_check_branch
          %428 = sbr.rel (%p426) target = $region52
        $region51: #{tpu_custom_call.1} parent=11 // pred_region
          _
        $region52: #{tpu_custom_call.1} parent=11 // pred_fallthru
          _
      $region12: #{tpu_custom_call.1} parent=5 // pred_fallthru
        _
      %p429 = scmp.lt.s32.totalorder %s30, 2
      // Predicated region
      $region53: #{tpu_custom_call.1} parent=5 // pred_check
        %p430 = pneg %p429
      $region54: #{tpu_custom_call.1} parent=5 // pred_check_branch
        %432 = sbr.rel (%p430) target = $region56
      $region55: #{tpu_custom_call.1} parent=5 // pred_region
        // Predicated region
        $region57: #{tpu_custom_call.1} parent=55 // pred_check
          %p433 = pneg %p50
        $region58: #{tpu_custom_call.1} parent=55 // pred_check_branch
          %435 = sbr.rel (%p433) target = $region60
        $region59: #{tpu_custom_call.1} parent=55 // pred_region
          %s436 = sand.u32 %s40, 1
          %s437 = scalar_lea.sflag [#allocation3], %s436
          %s438 = sand.u32 %s40, 1
          %s439 = smul.addr %s438, 32
          %s440 = scalar_lea.vmem [#allocation2], %s439
          %s442 = ssub.s32 512, 512
          %443 = vsyncadd %s437, %s442
          %s444 = smul.addr %s30, 4
          %s445 = smul.addr %s444, 128
          %s446 = scalar_lea.hbm %s0, %s445
          %s447 = sshll.u32 %s440, 4
          %s448 = int_to_ptr.vmem [resolvable:$true] %s447
          %453 = dma.hbm_to_vmem [thread:$0]  %s446, 512, %s448, %s437, 256, 256, 16
        $region60: #{tpu_custom_call.1} parent=55 // pred_fallthru
          _
        // Predicated region
        $region61: #{tpu_custom_call.1} parent=55 // pred_check
          %p454 = pneg %p76
        $region62: #{tpu_custom_call.1} parent=55 // pred_check_branch
          %456 = sbr.rel (%p454) target = $region64
        $region63: #{tpu_custom_call.1} parent=55 // pred_region
          %s457 = sand.u32 %s30, 1
          %s458 = scalar_lea.sflag [#allocation6], %s457
          %s459 = sand.u32 %s66, 1
          %s460 = smul.addr %s459, 32
          %s461 = scalar_lea.vmem [#allocation5], %s460
          %s463 = ssub.s32 512, 512
          %464 = vsyncadd %s458, %s463
          %s465 = smul.addr %s30, 4
          %s466 = smul.addr %s465, 128
          %s467 = scalar_lea.hbm %s1, %s466
          %s468 = sshll.u32 %s461, 4
          %s469 = int_to_ptr.vmem [resolvable:$true] %s468
          %474 = dma.hbm_to_vmem [thread:$0]  %s467, 512, %s469, %s458, 256, 256, 16
        $region64: #{tpu_custom_call.1} parent=55 // pred_fallthru
          _
        // Predicated region
        $region65: #{tpu_custom_call.1} parent=55 // pred_check
          %p475 = pneg %p102
        $region66: #{tpu_custom_call.1} parent=55 // pred_check_branch
          %477 = sbr.rel (%p475) target = $region68
        $region67: #{tpu_custom_call.1} parent=55 // pred_region
          %p478 = scmp.lt.s32.totalorder %s30, 1
          %s479 = scalar_select %p478, %s30, 1
          %s480 = smul.addr %s479, 2
          %s481 = smul.addr %s480, 8
          %s482 = scalar_lea.vmem %s2, %s481
        $region68: #{tpu_custom_call.1} parent=55 // pred_fallthru
          _
      $region56: #{tpu_custom_call.1} parent=5 // pred_fallthru
        _
      %p483 = scmp.le.s32.totalorder 1, %s30
      %p484 = scmp.lt.s32.totalorder %s30, 3
      %p485 = pnand %p483, %p484
      %p486 = pneg %p485
      // Predicated region
      $region69: #{tpu_custom_call.1} parent=5 // pred_check
        _
      $region70: #{tpu_custom_call.1} parent=5 // pred_check_branch
        %488 = sbr.rel (%p485) target = $region72
      $region71: #{tpu_custom_call.1} parent=5 // pred_region
        %s489 = ssub.s32 %s30, 1
        %s490 = sand.u32 %s43, 1
        %s491 = scalar_lea.sflag [#allocation3], %s490
        %s492 = sand.u32 %s43, 1
        %s493 = smul.addr %s492, 32
        %s494 = scalar_lea.vmem [#allocation2], %s493
        // Predicated region
        $region73: #{tpu_custom_call.1} parent=71 // pred_check
          %p495 = pneg %p56
        $region74: #{tpu_custom_call.1} parent=71 // pred_check_branch
          %497 = sbr.rel (%p495) target = $region76
        $region75: #{tpu_custom_call.1} parent=71 // pred_region
          %498 = dma.done %s491, 512
        $region76: #{tpu_custom_call.1} parent=71 // pred_fallthru
          _
        %s499 = sand.u32 %s35, 1
        %s500 = scalar_lea.sflag [#allocation6], %s499
        %s501 = sand.u32 %s69, 1
        %s502 = smul.addr %s501, 32
        %s503 = scalar_lea.vmem [#allocation5], %s502
        // Predicated region
        $region77: #{tpu_custom_call.1} parent=71 // pred_check
          %p504 = pneg %p82
        $region78: #{tpu_custom_call.1} parent=71 // pred_check_branch
          %506 = sbr.rel (%p504) target = $region80
        $region79: #{tpu_custom_call.1} parent=71 // pred_region
          %507 = dma.done %s500, 512
        $region80: #{tpu_custom_call.1} parent=71 // pred_fallthru
          _
        // Predicated region
        $region81: #{tpu_custom_call.1} parent=71 // pred_check
          %p508 = pneg %p150
        $region82: #{tpu_custom_call.1} parent=71 // pred_check_branch
          %510 = sbr.rel (%p508) target = $region84
        $region83: #{tpu_custom_call.1} parent=71 // pred_region
          %511 = dma.done [#allocation6], 32
        $region84: #{tpu_custom_call.1} parent=71 // pred_fallthru
          _
        // Predicated region
        $region85: #{tpu_custom_call.1} parent=71 // pred_check
          %p512 = pneg %p171
        $region86: #{tpu_custom_call.1} parent=71 // pred_check_branch
          %514 = sbr.rel (%p512) target = $region88
        $region87: #{tpu_custom_call.1} parent=71 // pred_region
          %515 = dma.done [#allocation9], 32
        $region88: #{tpu_custom_call.1} parent=71 // pred_fallthru
          _
        // Predicated region
        $region89: #{tpu_custom_call.1} parent=71 // pred_check
          %p516 = pneg %p192
        $region90: #{tpu_custom_call.1} parent=71 // pred_check_branch
          %518 = sbr.rel (%p516) target = $region92
        $region91: #{tpu_custom_call.1} parent=71 // pred_region
          %519 = dma.done [#allocation9], 32
        $region92: #{tpu_custom_call.1} parent=71 // pred_fallthru
          _
        // Predicated region
        $region93: #{tpu_custom_call.1} parent=71 // pred_check
          %p520 = pneg %p213
        $region94: #{tpu_custom_call.1} parent=71 // pred_check_branch
          %522 = sbr.rel (%p520) target = $region96
        $region95: #{tpu_custom_call.1} parent=71 // pred_region
          %523 = dma.done [#allocation12], 32
        $region96: #{tpu_custom_call.1} parent=71 // pred_fallthru
          _
        // Predicated region
        $region97: #{tpu_custom_call.1} parent=71 // pred_check
          %p524 = pneg %p234
        $region98: #{tpu_custom_call.1} parent=71 // pred_check_branch
          %526 = sbr.rel (%p524) target = $region100
        $region99: #{tpu_custom_call.1} parent=71 // pred_region
          %527 = dma.done [#allocation12], 32
        $region100: #{tpu_custom_call.1} parent=71 // pred_fallthru
          _
        %s528 = sand.u32 %s43, 1
        %s529 = scalar_lea.sflag [#allocation3], %s528
        %s530 = sand.u32 %s43, 1
        %s531 = smul.addr %s530, 32
        %s532 = scalar_lea.vmem [#allocation2], %s531
        %p533 = pneg %p56
        %p534 = pneg %p53
        %s535 = sand.u32 %s35, 1
        %s536 = scalar_lea.sflag [#allocation6], %s535
        %s537 = sand.u32 %s69, 1
        %s538 = smul.addr %s537, 32
        %s539 = scalar_lea.vmem [#allocation5], %s538
        %p540 = pneg %p82
        %p541 = pneg %p79
        %p542 = scmp.lt.s32.totalorder %s35, 1
        %s543 = scalar_select %p542, %s35, 1
        %s544 = smul.addr %s543, 2
        %s545 = smul.addr %s544, 8
        %s546 = scalar_lea.vmem %s2, %s545
        %p547 = pneg %p108
        %p548 = pneg %p105
        %p549 = pneg %p129
        %p550 = pneg %p126
        %p551 = pneg %p150
        %p552 = pneg %p147
        %p553 = pneg %p171
        %p554 = pneg %p168
        %p555 = pneg %p192
        %p556 = pneg %p189
        %p557 = pneg %p213
        %p558 = pneg %p210
        %p559 = pneg %p234
        %p560 = pneg %p231
        %p561 = pneg %p255
        %p562 = pneg %p252
        %p563 = pneg %p276
        %p564 = pneg %p273
        %p565 = pneg %p297
        %p566 = pneg %p294
        %p567 = pneg %p318
        %p568 = pneg %p315
        %p569 = pneg %p344
        %p570 = pneg %p341
        %s571 = sand.u32 %s331, 1
        %s572 = scalar_lea.sflag [#allocation4], %s571
        %s573 = sand.u32 %s331, 1
        %s574 = smul.addr %s573, 32
        %s575 = scalar_lea.vmem [#allocation14], %s574
        %p576 = scmp.lt.s32.totalorder %s35, 1
        %s577 = scalar_select %p576, %s35, 1
        %s578 = smul.addr %s577, 2
        %s579 = smul.addr %s578, 8
        %s580 = scalar_lea.vmem %s2, %s579
        %v581 = vld [vmem:[%s494] sm:$0xff]
        %v582 = vld [vmem:[%s494 + $0x8] sm:$0xff]
        %v583 = vld [vmem:[%s494 + $0x10] sm:$0xff]
        %v584 = vld [vmem:[%s494 + $0x18] sm:$0xff]
        %v585 = vadd.f32 %v581, %v582
        %586 = vadd.xlane.f32.xlu0 %v585
        %v587 = vpop.xlane.xlu0 %586
        %v588 = vadd.f32 %v583, %v584
        %589 = vadd.xlane.f32.xlu0 %v588
        %v590 = vpop.xlane.xlu0 %589
        %v591 = vmul.f32 %v587, 0.00390625
        %v592 = vmul.f32 %v590, 0.00390625
        %v593 = vld [vmem:[%s3] sm:$0x3]
        %v594 = vld [vmem:[%s503] sm:$0xff]
        %v595 = vld [vmem:[%s503 + $0x8] sm:$0xff]
        %v596 = vld [vmem:[%s503 + $0x10] sm:$0xff]
        %v597 = vld [vmem:[%s503 + $0x18] sm:$0xff]
        %v598 = vadd.f32 %v594, %v595
        %599 = vadd.xlane.f32.xlu0 %v598
        %v600 = vpop.xlane.xlu0 %599
        %v601 = vadd.f32 %v596, %v597
        %602 = vadd.xlane.f32.xlu0 %v601
        %v603 = vpop.xlane.xlu0 %602
        %v604 = vmul.f32 %v600, 0.00390625
        %v605 = vmul.f32 %v603, 0.00390625
        %v606 = vld [vmem:[#allocation7] sm:$0x3]
        %vm607 = vcmask 130048
        %v609 = vsel %vm607, %v606, 0
        %611 = vmatprep.subr.mxu0 0.0
        %612 = vmatpush1.msra.mxu0 %v604
        %613 = vmatprep.subr.mxu0 0.0
        %614 = vmatpush1.msra.mxu0 %v605
        %615 = vmatprep.subr.mxu0 0.0
        %616 = vmatpush1.msra.mxu0 0.0
        %617 = vmatprep.subr.mxu0 0.0
        %618 = vmatpush1.msra.mxu0 0.0
        %619 = vmatprep.subr.mxu0 0.0
        %620 = vmatpush1.msra.mxu0 0.0
        %621 = vmatprep.subr.mxu0 0.0
        %622 = vmatpush1.msra.mxu0 0.0
        %623 = vmatprep.subr.mxu0 0.0
        %624 = vmatpush1.msra.mxu0 0.0
        %625 = vmatprep.subr.mxu0 0.0
        %626 = vmatpush1.msra.mxu0 0.0
        %627 = vmatprep.subr.mxu0 0.0
        %628 = vmatpush1.msra.mxu0 0.0
        %629 = vmatprep.subr.mxu0 0.0
        %630 = vmatpush1.msra.mxu0 0.0
        %631 = vmatprep.subr.mxu0 0.0
        %632 = vmatpush1.msra.mxu0 0.0
        %633 = vmatprep.subr.mxu0 0.0
        %634 = vmatpush1.msra.mxu0 0.0
        %635 = vmatprep.subr.mxu0 0.0
        %636 = vmatpush1.msra.mxu0 0.0
        %637 = vmatprep.subr.mxu0 0.0
        %638 = vmatpush1.msra.mxu0 0.0
        %639 = vmatprep.subr.mxu0 0.0
        %640 = vmatpush1.msra.mxu0 0.0
        %641 = vmatprep.subr.mxu0 0.0
        %642 = vmatpush1.msra.mxu0 0.0
        %643 = vmatprep.subr.mxu0 0.0
        %644 = vmatpush1.msra.mxu0 0.0
        %645 = vmatprep.subr.mxu0 0.0
        %646 = vmatpush1.msra.mxu0 0.0
        %647 = vmatprep.subr.mxu0 0.0
        %648 = vmatpush1.msra.mxu0 0.0
        %649 = vmatprep.subr.mxu0 0.0
        %650 = vmatpush1.msra.mxu0 0.0
        %651 = vmatprep.subr.mxu0 0.0
        %652 = vmatpush1.msra.mxu0 0.0
        %653 = vmatprep.subr.mxu0 0.0
        %654 = vmatpush1.msra.mxu0 0.0
        %655 = vmatprep.subr.mxu0 0.0
        %656 = vmatpush1.msra.mxu0 0.0
        %657 = vmatprep.subr.mxu0 0.0
        %658 = vmatpush1.msra.mxu0 0.0
        %659 = vmatprep.subr.mxu0 0.0
        %660 = vmatpush1.msra.mxu0 0.0
        %661 = vmatprep.subr.mxu0 0.0
        %662 = vmatpush1.msra.mxu0 0.0
        %663 = vmatprep.subr.mxu0 0.0
        %664 = vmatpush1.msra.mxu0 0.0
        %665 = vmatprep.subr.mxu0 0.0
        %666 = vmatpush1.msra.mxu0 0.0
        %667 = vmatprep.subr.mxu0 0.0
        %668 = vmatpush1.msra.mxu0 0.0
        %669 = vmatprep.subr.mxu0 0.0
        %670 = vmatpush1.msra.mxu0 0.0
        %671 = vmatprep.subr.mxu0 0.0
        %672 = vmatpush1.msra.mxu0 0.0
        %673 = vmatprep.subr.mxu0 0.0
        %674 = vmatpush1.msra.mxu0 0.0
        %675 = vmatprep.mubr.f32.mxu0 0.0
        %676 = vmatmul.mubr.f32.gmra.mrb[0].mxu0 %v609
        %v677 = vpop.f32.mrb[0].mxu0
        %v678 = vadd.f32 0.0, %v677
        %v679 = vpop.f32.mrb[0].mxu0
        %680 = vdwg.mxu0
        %v682 = vsel %vm607, %v593, 0
        %684 = vmatprep.subr.mxu0 0.0
        %685 = vmatpush1.msra.mxu0 %v591
        %686 = vmatprep.subr.mxu0 0.0
        %687 = vmatpush1.msra.mxu0 %v592
        %688 = vmatprep.subr.mxu0 0.0
        %689 = vmatpush1.msra.mxu0 0.0
        %690 = vmatprep.subr.mxu0 0.0
        %691 = vmatpush1.msra.mxu0 0.0
        %692 = vmatprep.subr.mxu0 0.0
        %693 = vmatpush1.msra.mxu0 0.0
        %694 = vmatprep.subr.mxu0 0.0
        %695 = vmatpush1.msra.mxu0 0.0
        %696 = vmatprep.subr.mxu0 0.0
        %697 = vmatpush1.msra.mxu0 0.0
        %698 = vmatprep.subr.mxu0 0.0
        %699 = vmatpush1.msra.mxu0 0.0
        %700 = vmatprep.subr.mxu0 0.0
        %701 = vmatpush1.msra.mxu0 0.0
        %702 = vmatprep.subr.mxu0 0.0
        %703 = vmatpush1.msra.mxu0 0.0
        %704 = vmatprep.subr.mxu0 0.0
        %705 = vmatpush1.msra.mxu0 0.0
        %706 = vmatprep.subr.mxu0 0.0
        %707 = vmatpush1.msra.mxu0 0.0
        %708 = vmatprep.subr.mxu0 0.0
        %709 = vmatpush1.msra.mxu0 0.0
        %710 = vmatprep.subr.mxu0 0.0
        %711 = vmatpush1.msra.mxu0 0.0
        %712 = vmatprep.subr.mxu0 0.0
        %713 = vmatpush1.msra.mxu0 0.0
        %714 = vmatprep.subr.mxu0 0.0
        %715 = vmatpush1.msra.mxu0 0.0
        %716 = vmatprep.subr.mxu0 0.0
        %717 = vmatpush1.msra.mxu0 0.0
        %718 = vmatprep.subr.mxu0 0.0
        %719 = vmatpush1.msra.mxu0 0.0
        %720 = vmatprep.subr.mxu0 0.0
        %721 = vmatpush1.msra.mxu0 0.0
        %722 = vmatprep.subr.mxu0 0.0
        %723 = vmatpush1.msra.mxu0 0.0
        %724 = vmatprep.subr.mxu0 0.0
        %725 = vmatpush1.msra.mxu0 0.0
        %726 = vmatprep.subr.mxu0 0.0
        %727 = vmatpush1.msra.mxu0 0.0
        %728 = vmatprep.subr.mxu0 0.0
        %729 = vmatpush1.msra.mxu0 0.0
        %730 = vmatprep.subr.mxu0 0.0
        %731 = vmatpush1.msra.mxu0 0.0
        %732 = vmatprep.subr.mxu0 0.0
        %733 = vmatpush1.msra.mxu0 0.0
        %734 = vmatprep.subr.mxu0 0.0
        %735 = vmatpush1.msra.mxu0 0.0
        %736 = vmatprep.subr.mxu0 0.0
        %737 = vmatpush1.msra.mxu0 0.0
        %738 = vmatprep.subr.mxu0 0.0
        %739 = vmatpush1.msra.mxu0 0.0
        %740 = vmatprep.subr.mxu0 0.0
        %741 = vmatpush1.msra.mxu0 0.0
        %742 = vmatprep.subr.mxu0 0.0
        %743 = vmatpush1.msra.mxu0 0.0
        %744 = vmatprep.subr.mxu0 0.0
        %745 = vmatpush1.msra.mxu0 0.0
        %746 = vmatprep.subr.mxu0 0.0
        %747 = vmatpush1.msra.mxu0 0.0
        %748 = vmatprep.mubr.f32.mxu0 0.0
        %749 = vmatmul.mubr.f32.gmra.mrb[0].mxu0 %v682
        %v750 = vpop.f32.mrb[0].mxu0
        %v751 = vadd.f32 %v678, %v750
        %v752 = vpop.f32.mrb[0].mxu0
        %753 = vdwg.mxu0
        %v754 = vld [vmem:[%s580] sm:$0xff]
        %v755 = vld [vmem:[%s580 + $0x8] sm:$0xff]
        %v756 = vadd.f32 %v754, %v755
        %757 = vadd.xlane.f32.xlu0 %v756
        %v758 = vpop.xlane.xlu0 %757
        %v759 = vmul.f32 %v758, 0.00390625
        %v760 = vld [vmem:[#allocation8] sm:$0x3]
        %vm761 = vcmask 64512
        %v763 = vsel %vm761, %v760, 0
        %765 = vmatprep.subr.mxu0 0.0
        %766 = vmatpush1.msra.mxu0 %v759
        %767 = vmatprep.subr.mxu0 0.0
        %768 = vmatpush1.msra.mxu0 0.0
        %769 = vmatprep.subr.mxu0 0.0
        %770 = vmatpush1.msra.mxu0 0.0
        %771 = vmatprep.subr.mxu0 0.0
        %772 = vmatpush1.msra.mxu0 0.0
        %773 = vmatprep.subr.mxu0 0.0
        %774 = vmatpush1.msra.mxu0 0.0
        %775 = vmatprep.subr.mxu0 0.0
        %776 = vmatpush1.msra.mxu0 0.0
        %777 = vmatprep.subr.mxu0 0.0
        %778 = vmatpush1.msra.mxu0 0.0
        %779 = vmatprep.subr.mxu0 0.0
        %780 = vmatpush1.msra.mxu0 0.0
        %781 = vmatprep.subr.mxu0 0.0
        %782 = vmatpush1.msra.mxu0 0.0
        %783 = vmatprep.subr.mxu0 0.0
        %784 = vmatpush1.msra.mxu0 0.0
        %785 = vmatprep.subr.mxu0 0.0
        %786 = vmatpush1.msra.mxu0 0.0
        %787 = vmatprep.subr.mxu0 0.0
        %788 = vmatpush1.msra.mxu0 0.0
        %789 = vmatprep.subr.mxu0 0.0
        %790 = vmatpush1.msra.mxu0 0.0
        %791 = vmatprep.subr.mxu0 0.0
        %792 = vmatpush1.msra.mxu0 0.0
        %793 = vmatprep.subr.mxu0 0.0
        %794 = vmatpush1.msra.mxu0 0.0
        %795 = vmatprep.subr.mxu0 0.0
        %796 = vmatpush1.msra.mxu0 0.0
        %797 = vmatprep.subr.mxu0 0.0
        %798 = vmatpush1.msra.mxu0 0.0
        %799 = vmatprep.subr.mxu0 0.0
        %800 = vmatpush1.msra.mxu0 0.0
        %801 = vmatprep.subr.mxu0 0.0
        %802 = vmatpush1.msra.mxu0 0.0
        %803 = vmatprep.subr.mxu0 0.0
        %804 = vmatpush1.msra.mxu0 0.0
        %805 = vmatprep.subr.mxu0 0.0
        %806 = vmatpush1.msra.mxu0 0.0
        %807 = vmatprep.subr.mxu0 0.0
        %808 = vmatpush1.msra.mxu0 0.0
        %809 = vmatprep.subr.mxu0 0.0
        %810 = vmatpush1.msra.mxu0 0.0
        %811 = vmatprep.subr.mxu0 0.0
        %812 = vmatpush1.msra.mxu0 0.0
        %813 = vmatprep.subr.mxu0 0.0
        %814 = vmatpush1.msra.mxu0 0.0
        %815 = vmatprep.subr.mxu0 0.0
        %816 = vmatpush1.msra.mxu0 0.0
        %817 = vmatprep.subr.mxu0 0.0
        %818 = vmatpush1.msra.mxu0 0.0
        %819 = vmatprep.subr.mxu0 0.0
        %820 = vmatpush1.msra.mxu0 0.0
        %821 = vmatprep.subr.mxu0 0.0
        %822 = vmatpush1.msra.mxu0 0.0
        %823 = vmatprep.subr.mxu0 0.0
        %824 = vmatpush1.msra.mxu0 0.0
        %825 = vmatprep.subr.mxu0 0.0
        %826 = vmatpush1.msra.mxu0 0.0
        %827 = vmatprep.subr.mxu0 0.0
        %828 = vmatpush1.msra.mxu0 0.0
        %829 = vmatprep.mubr.f32.mxu0 0.0
        %830 = vmatmul.mubr.f32.gmra.mrb[0].mxu0 %v763
        %v831 = vpop.f32.mrb[0].mxu0
        %v832 = vadd.f32 0.0, %v831
        %v833 = vpop.f32.mrb[0].mxu0
        %834 = vdwg.mxu0
        %v835 = vadd.f32 %v751, %v832
        %v836 = vmax.f32 %v835, 0.0
        %v837 = vld [vmem:[#allocation10] sm:$0x3]
        %839 = vset.pattern.permute.xlu0 0
        %840 = vperm.xlu0 %839, %v836
        %v841 = vpop.permute.xlu0 %840
        %v843 = vmul.f32 %v837, %v841
        %vm844 = vcmask 123904
        %v845 = vsel %vm844, %v843, 0.0
        %v846 = vrot.slane %v845, 4
        %v847 = vadd.f32 %v845, %v846
        %v848 = vrot.slane %v847, 2
        %v849 = vadd.f32 %v847, %v848
        %v850 = vrot.slane %v849, 1
        %v851 = vadd.f32 %v849, %v850
        %v852 = vxor.u32 %v851, 2147483648
        %v853 = vmul.f32 %v852, 1.442695
        %v854 = vpow.pop %v853
        %v855 = vadd.f32 %v854, 1.0
        %v856 = vrcp.pop %v855
        %v857 = vmul.f32 1.0, %v856
        %v858 = vld [vmem:[%s9] sm:$0xff]
        %v859 = vld [vmem:[%s9 + $0x8] sm:$0xff]
        %v860 = vmul.f32 %v858, %v857
        %v861 = vmul.f32 %v859, %v857
        %v862 = vld [vmem:[#allocation11] sm:$0x3]
        %v863 = vmul.f32 %v862, %v841
        %v864 = vsel %vm844, %v863, 0.0
        %v865 = vrot.slane %v864, 4
        %v866 = vadd.f32 %v864, %v865
        %v867 = vrot.slane %v866, 2
        %v868 = vadd.f32 %v866, %v867
        %v869 = vrot.slane %v868, 1
        %v870 = vadd.f32 %v868, %v869
        %v871 = vxor.u32 %v870, 2147483648
        %v872 = vmul.f32 %v871, 1.442695
        %v873 = vpow.pop %v872
        %v874 = vadd.f32 %v873, 1.0
        %v875 = vrcp.pop %v874
        %v876 = vmul.f32 1.0, %v875
        %v877 = vld [vmem:[%s10] sm:$0xff]
        %v878 = vld [vmem:[%s10 + $0x8] sm:$0xff]
        %v879 = vmul.f32 %v877, %v876
        %v880 = vmul.f32 %v878, %v876
        %v882 = vsel %vm607, %v879, 0
        %v885 = vsel %vm607, %v880, 0
        %887 = vmatprep.subr.mxu0 %v595
        %888 = vmatpush1.msra.mxu0 %v594
        %889 = vmatprep.subr.mxu0 %v597
        %890 = vmatpush1.msra.mxu0 %v596
        %891 = vmatprep.subr.mxu0 0.0
        %892 = vmatpush1.msra.mxu0 0.0
        %893 = vmatprep.subr.mxu0 0.0
        %894 = vmatpush1.msra.mxu0 0.0
        %895 = vmatprep.subr.mxu0 0.0
        %896 = vmatpush1.msra.mxu0 0.0
        %897 = vmatprep.subr.mxu0 0.0
        %898 = vmatpush1.msra.mxu0 0.0
        %899 = vmatprep.subr.mxu0 0.0
        %900 = vmatpush1.msra.mxu0 0.0
        %901 = vmatprep.subr.mxu0 0.0
        %902 = vmatpush1.msra.mxu0 0.0
        %903 = vmatprep.subr.mxu0 0.0
        %904 = vmatpush1.msra.mxu0 0.0
        %905 = vmatprep.subr.mxu0 0.0
        %906 = vmatpush1.msra.mxu0 0.0
        %907 = vmatprep.subr.mxu0 0.0
        %908 = vmatpush1.msra.mxu0 0.0
        %909 = vmatprep.subr.mxu0 0.0
        %910 = vmatpush1.msra.mxu0 0.0
        %911 = vmatprep.subr.mxu0 0.0
        %912 = vmatpush1.msra.mxu0 0.0
        %913 = vmatprep.subr.mxu0 0.0
        %914 = vmatpush1.msra.mxu0 0.0
        %915 = vmatprep.subr.mxu0 0.0
        %916 = vmatpush1.msra.mxu0 0.0
        %917 = vmatprep.subr.mxu0 0.0
        %918 = vmatpush1.msra.mxu0 0.0
        %919 = vmatprep.subr.mxu0 0.0
        %920 = vmatpush1.msra.mxu0 0.0
        %921 = vmatprep.subr.mxu0 0.0
        %922 = vmatpush1.msra.mxu0 0.0
        %923 = vmatprep.subr.mxu0 0.0
        %924 = vmatpush1.msra.mxu0 0.0
        %925 = vmatprep.subr.mxu0 0.0
        %926 = vmatpush1.msra.mxu0 0.0
        %927 = vmatprep.subr.mxu0 0.0
        %928 = vmatpush1.msra.mxu0 0.0
        %929 = vmatprep.subr.mxu0 0.0
        %930 = vmatpush1.msra.mxu0 0.0
        %931 = vmatprep.subr.mxu0 0.0
        %932 = vmatpush1.msra.mxu0 0.0
        %933 = vmatprep.subr.mxu0 0.0
        %934 = vmatpush1.msra.mxu0 0.0
        %935 = vmatprep.subr.mxu0 0.0
        %936 = vmatpush1.msra.mxu0 0.0
        %937 = vmatprep.subr.mxu0 0.0
        %938 = vmatpush1.msra.mxu0 0.0
        %939 = vmatprep.subr.mxu0 0.0
        %940 = vmatpush1.msra.mxu0 0.0
        %941 = vmatprep.subr.mxu0 0.0
        %942 = vmatpush1.msra.mxu0 0.0
        %943 = vmatprep.subr.mxu0 0.0
        %944 = vmatpush1.msra.mxu0 0.0
        %945 = vmatprep.subr.mxu0 0.0
        %946 = vmatpush1.msra.mxu0 0.0
        %947 = vmatprep.subr.mxu0 0.0
        %948 = vmatpush1.msra.mxu0 0.0
        %949 = vmatprep.subr.mxu0 0.0
        %950 = vmatpush1.msra.mxu0 0.0
        %951 = vmatprep.mubr.f32.mxu0 0.0
        %952 = vmatmul.mubr.f32.gmra.mrb[0].mxu0 %v882
        %v953 = vpop.f32.mrb[0].mxu0
        %v954 = vadd.f32 0.0, %v953
        %v955 = vpop.f32.mrb[0].mxu0
        %v956 = vadd.f32 0.0, %v955
        %957 = vmatprep.mubr.f32.mxu0 0.0
        %958 = vmatmul.mubr.f32.gmra.mrb[0].mxu0 %v885
        %v959 = vpop.f32.mrb[0].mxu0
        %v960 = vadd.f32 0.0, %v959
        %v961 = vpop.f32.mrb[0].mxu0
        %v962 = vadd.f32 0.0, %v961
        %963 = vdwg.mxu0
        %v965 = vsel %vm607, %v860, 0
        %v968 = vsel %vm607, %v861, 0
        %970 = vmatprep.subr.mxu0 %v582
        %971 = vmatpush1.msra.mxu0 %v581
        %972 = vmatprep.subr.mxu0 %v584
        %973 = vmatpush1.msra.mxu0 %v583
        %974 = vmatprep.subr.mxu0 0.0
        %975 = vmatpush1.msra.mxu0 0.0
        %976 = vmatprep.subr.mxu0 0.0
        %977 = vmatpush1.msra.mxu0 0.0
        %978 = vmatprep.subr.mxu0 0.0
        %979 = vmatpush1.msra.mxu0 0.0
        %980 = vmatprep.subr.mxu0 0.0
        %981 = vmatpush1.msra.mxu0 0.0
        %982 = vmatprep.subr.mxu0 0.0
        %983 = vmatpush1.msra.mxu0 0.0
        %984 = vmatprep.subr.mxu0 0.0
        %985 = vmatpush1.msra.mxu0 0.0
        %986 = vmatprep.subr.mxu0 0.0
        %987 = vmatpush1.msra.mxu0 0.0
        %988 = vmatprep.subr.mxu0 0.0
        %989 = vmatpush1.msra.mxu0 0.0
        %990 = vmatprep.subr.mxu0 0.0
        %991 = vmatpush1.msra.mxu0 0.0
        %992 = vmatprep.subr.mxu0 0.0
        %993 = vmatpush1.msra.mxu0 0.0
        %994 = vmatprep.subr.mxu0 0.0
        %995 = vmatpush1.msra.mxu0 0.0
        %996 = vmatprep.subr.mxu0 0.0
        %997 = vmatpush1.msra.mxu0 0.0
        %998 = vmatprep.subr.mxu0 0.0
        %999 = vmatpush1.msra.mxu0 0.0
        %1000 = vmatprep.subr.mxu0 0.0
        %1001 = vmatpush1.msra.mxu0 0.0
        %1002 = vmatprep.subr.mxu0 0.0
        %1003 = vmatpush1.msra.mxu0 0.0
        %1004 = vmatprep.subr.mxu0 0.0
        %1005 = vmatpush1.msra.mxu0 0.0
        %1006 = vmatprep.subr.mxu0 0.0
        %1007 = vmatpush1.msra.mxu0 0.0
        %1008 = vmatprep.subr.mxu0 0.0
        %1009 = vmatpush1.msra.mxu0 0.0
        %1010 = vmatprep.subr.mxu0 0.0
        %1011 = vmatpush1.msra.mxu0 0.0
        %1012 = vmatprep.subr.mxu0 0.0
        %1013 = vmatpush1.msra.mxu0 0.0
        %1014 = vmatprep.subr.mxu0 0.0
        %1015 = vmatpush1.msra.mxu0 0.0
        %1016 = vmatprep.subr.mxu0 0.0
        %1017 = vmatpush1.msra.mxu0 0.0
        %1018 = vmatprep.subr.mxu0 0.0
        %1019 = vmatpush1.msra.mxu0 0.0
        %1020 = vmatprep.subr.mxu0 0.0
        %1021 = vmatpush1.msra.mxu0 0.0
        %1022 = vmatprep.subr.mxu0 0.0
        %1023 = vmatpush1.msra.mxu0 0.0
        %1024 = vmatprep.subr.mxu0 0.0
        %1025 = vmatpush1.msra.mxu0 0.0
        %1026 = vmatprep.subr.mxu0 0.0
        %1027 = vmatpush1.msra.mxu0 0.0
        %1028 = vmatprep.subr.mxu0 0.0
        %1029 = vmatpush1.msra.mxu0 0.0
        %1030 = vmatprep.subr.mxu0 0.0
        %1031 = vmatpush1.msra.mxu0 0.0
        %1032 = vmatprep.subr.mxu0 0.0
        %1033 = vmatpush1.msra.mxu0 0.0
        %1034 = vmatprep.mubr.f32.mxu0 0.0
        %1035 = vmatmul.mubr.f32.gmra.mrb[0].mxu0 %v965
        %v1036 = vpop.f32.mrb[0].mxu0
        %v1037 = vadd.f32 %v954, %v1036
        %v1038 = vpop.f32.mrb[0].mxu0
        %v1039 = vadd.f32 %v956, %v1038
        %1040 = vmatprep.mubr.f32.mxu0 0.0
        %1041 = vmatmul.mubr.f32.gmra.mrb[0].mxu0 %v968
        %v1042 = vpop.f32.mrb[0].mxu0
        %v1043 = vadd.f32 %v960, %v1042
        %v1044 = vpop.f32.mrb[0].mxu0
        %v1045 = vadd.f32 %v962, %v1044
        %1046 = vdwg.mxu0
        %v1047 = vld [vmem:[#allocation13] sm:$0x3]
        %v1048 = vmul.f32 %v1047, %v841
        %vm1049 = vcmask 58368
        %v1050 = vsel %vm1049, %v1048, 0.0
        %v1051 = vrot.slane %v1050, 4
        %v1052 = vadd.f32 %v1050, %v1051
        %v1053 = vrot.slane %v1052, 2
        %v1054 = vadd.f32 %v1052, %v1053
        %v1055 = vrot.slane %v1054, 1
        %v1056 = vadd.f32 %v1054, %v1055
        %v1057 = vxor.u32 %v1056, 2147483648
        %v1058 = vmul.f32 %v1057, 1.442695
        %v1059 = vpow.pop %v1058
        %v1060 = vadd.f32 %v1059, 1.0
        %v1061 = vrcp.pop %v1060
        %v1062 = vmul.f32 1.0, %v1061
        %v1063 = vld [vmem:[%s11] sm:$0xff]
        %v1064 = vld [vmem:[%s11 + $0x8] sm:$0xff]
        %v1065 = vmul.f32 %v1063, %v1062
        %v1066 = vmul.f32 %v1064, %v1062
        %v1068 = vsel %vm761, %v1065, 0
        %v1071 = vsel %vm761, %v1066, 0
        %1073 = vmatprep.subr.mxu0 %v755
        %1074 = vmatpush1.msra.mxu0 %v754
        %1075 = vmatprep.subr.mxu0 0.0
        %1076 = vmatpush1.msra.mxu0 0.0
        %1077 = vmatprep.subr.mxu0 0.0
        %1078 = vmatpush1.msra.mxu0 0.0
        %1079 = vmatprep.subr.mxu0 0.0
        %1080 = vmatpush1.msra.mxu0 0.0
        %1081 = vmatprep.subr.mxu0 0.0
        %1082 = vmatpush1.msra.mxu0 0.0
        %1083 = vmatprep.subr.mxu0 0.0
        %1084 = vmatpush1.msra.mxu0 0.0
        %1085 = vmatprep.subr.mxu0 0.0
        %1086 = vmatpush1.msra.mxu0 0.0
        %1087 = vmatprep.subr.mxu0 0.0
        %1088 = vmatpush1.msra.mxu0 0.0
        %1089 = vmatprep.subr.mxu0 0.0
        %1090 = vmatpush1.msra.mxu0 0.0
        %1091 = vmatprep.subr.mxu0 0.0
        %1092 = vmatpush1.msra.mxu0 0.0
        %1093 = vmatprep.subr.mxu0 0.0
        %1094 = vmatpush1.msra.mxu0 0.0
        %1095 = vmatprep.subr.mxu0 0.0
        %1096 = vmatpush1.msra.mxu0 0.0
        %1097 = vmatprep.subr.mxu0 0.0
        %1098 = vmatpush1.msra.mxu0 0.0
        %1099 = vmatprep.subr.mxu0 0.0
        %1100 = vmatpush1.msra.mxu0 0.0
        %1101 = vmatprep.subr.mxu0 0.0
        %1102 = vmatpush1.msra.mxu0 0.0
        %1103 = vmatprep.subr.mxu0 0.0
        %1104 = vmatpush1.msra.mxu0 0.0
        %1105 = vmatprep.subr.mxu0 0.0
        %1106 = vmatpush1.msra.mxu0 0.0
        %1107 = vmatprep.subr.mxu0 0.0
        %1108 = vmatpush1.msra.mxu0 0.0
        %1109 = vmatprep.subr.mxu0 0.0
        %1110 = vmatpush1.msra.mxu0 0.0
        %1111 = vmatprep.subr.mxu0 0.0
        %1112 = vmatpush1.msra.mxu0 0.0
        %1113 = vmatprep.subr.mxu0 0.0
        %1114 = vmatpush1.msra.mxu0 0.0
        %1115 = vmatprep.subr.mxu0 0.0
        %1116 = vmatpush1.msra.mxu0 0.0
        %1117 = vmatprep.subr.mxu0 0.0
        %1118 = vmatpush1.msra.mxu0 0.0
        %1119 = vmatprep.subr.mxu0 0.0
        %1120 = vmatpush1.msra.mxu0 0.0
        %1121 = vmatprep.subr.mxu0 0.0
        %1122 = vmatpush1.msra.mxu0 0.0
        %1123 = vmatprep.subr.mxu0 0.0
        %1124 = vmatpush1.msra.mxu0 0.0
        %1125 = vmatprep.subr.mxu0 0.0
        %1126 = vmatpush1.msra.mxu0 0.0
        %1127 = vmatprep.subr.mxu0 0.0
        %1128 = vmatpush1.msra.mxu0 0.0
        %1129 = vmatprep.subr.mxu0 0.0
        %1130 = vmatpush1.msra.mxu0 0.0
        %1131 = vmatprep.subr.mxu0 0.0
        %1132 = vmatpush1.msra.mxu0 0.0
        %1133 = vmatprep.subr.mxu0 0.0
        %1134 = vmatpush1.msra.mxu0 0.0
        %1135 = vmatprep.subr.mxu0 0.0
        %1136 = vmatpush1.msra.mxu0 0.0
        %1137 = vmatprep.mubr.f32.mxu0 0.0
        %1138 = vmatmul.mubr.f32.gmra.mrb[0].mxu0 %v1068
        %v1139 = vpop.f32.mrb[0].mxu0
        %v1140 = vadd.f32 0.0, %v1139
        %v1141 = vpop.f32.mrb[0].mxu0
        %v1142 = vadd.f32 0.0, %v1141
        %1143 = vmatprep.mubr.f32.mxu0 0.0
        %1144 = vmatmul.mubr.f32.gmra.mrb[0].mxu0 %v1071
        %v1145 = vpop.f32.mrb[0].mxu0
        %v1146 = vadd.f32 0.0, %v1145
        %v1147 = vpop.f32.mrb[0].mxu0
        %v1148 = vadd.f32 0.0, %v1147
        %1149 = vdwg.mxu0
        %v1150 = vadd.f32 %v1037, %v1140
        %v1151 = vadd.f32 %v1039, %v1142
        %v1152 = vadd.f32 %v1043, %v1146
        %v1153 = vadd.f32 %v1045, %v1148
        %v1154 = vld [vmem:[%s12] sm:$0xff]
        %v1155 = vld [vmem:[%s12 + $0x8] sm:$0xff]
        %1157 = vset.pattern.permute.xlu0 0
        %1158 = vperm.xlu0 %1157, %v1154
        %v1159 = vpop.permute.xlu0 %1158
        %1162 = vset.pattern.permute.xlu0 0
        %1163 = vperm.xlu0 %1162, %v1155
        %v1164 = vpop.permute.xlu0 %1163
        %v1166 = vadd.f32 %v1150, %v1159
        %v1167 = vadd.f32 %v1151, %v1159
        %v1168 = vadd.f32 %v1152, %v1164
        %v1169 = vadd.f32 %v1153, %v1164
        %v1170 = vmax.f32 %v1166, 0.0
        %v1171 = vmax.f32 %v1167, 0.0
        %v1172 = vmax.f32 %v1168, 0.0
        %v1173 = vmax.f32 %v1169, 0.0
        %1174 = vst [vmem:[%s575] sm:$0xff] %v1170
        %1175 = vst [vmem:[%s575 + $0x8] sm:$0xff] %v1171
        %1176 = vst [vmem:[%s575 + $0x10] sm:$0xff] %v1172
        %1177 = vst [vmem:[%s575 + $0x18] sm:$0xff] %v1173
        %s1178 = sand.u32 %s331, 1
        %s1179 = scalar_lea.sflag [#allocation4], %s1178
        %s1180 = sand.u32 %s331, 1
        %s1181 = smul.addr %s1180, 32
        %s1182 = scalar_lea.vmem [#allocation14], %s1181
        // Predicated region
        $region101: #{tpu_custom_call.1} parent=71 // pred_check
          %p1183 = pneg %p341
        $region102: #{tpu_custom_call.1} parent=71 // pred_check_branch
          %1185 = sbr.rel (%p1183) target = $region104
        $region103: #{tpu_custom_call.1} parent=71 // pred_region
          %s1187 = ssub.s32 512, 512
          %1188 = vsyncadd %s1179, %s1187
          %s1189 = smul.addr %s35, 4
          %s1190 = smul.addr %s1189, 128
          %s1191 = scalar_lea.hbm %s13, %s1190
          %s1192 = sshll.u32 %s1182, 4
          %s1193 = int_to_ptr.vmem [resolvable:$true] %s1192
          %1198 = dma.vmem_to_hbm [thread:$0]  %s1193, 512, %s1191, %s1179, 256, 256, 16
        $region104: #{tpu_custom_call.1} parent=71 // pred_fallthru
          _
      $region72: #{tpu_custom_call.1} parent=5 // pred_fallthru
        _
      %p1199 = scmp.le.s32.totalorder 2, %s30
      // Predicated region
      $region105: #{tpu_custom_call.1} parent=5 // pred_check
        %p1200 = pneg %p1199
      $region106: #{tpu_custom_call.1} parent=5 // pred_check_branch
        %1202 = sbr.rel (%p1200) target = $region108
      $region107: #{tpu_custom_call.1} parent=5 // pred_region
        %s1203 = ssub.s32 %s30, 2
        // Predicated region
        $region109: #{tpu_custom_call.1} parent=107 // pred_check
          %p1204 = pneg %p347
        $region110: #{tpu_custom_call.1} parent=107 // pred_check_branch
          %1206 = sbr.rel (%p1204) target = $region112
        $region111: #{tpu_custom_call.1} parent=107 // pred_region
          %s1207 = sand.u32 %s332, 1
          %s1208 = scalar_lea.sflag [#allocation4], %s1207
          %s1209 = sand.u32 %s332, 1
          %s1210 = smul.addr %s1209, 32
          %s1211 = scalar_lea.vmem [#allocation14], %s1210
          %1212 = dma.done %s1208, 512
        $region112: #{tpu_custom_call.1} parent=107 // pred_fallthru
          _
      $region108: #{tpu_custom_call.1} parent=5 // pred_fallthru
        _
    $region6: #{tpu_custom_call.1} parent=1 // loop_footer
      %s34 = sadd.s32 1, %s30
    $region7: #{tpu_custom_call.1} parent=1 // loop_footer_branch
      %29 = sbr.rel target = $region3
    $region8: #{tpu_custom_call.1} parent=1 // loop_exit
      _
    %1213 = vsyncpa [#allocation3], 1
    %s1214 = scalar_lea.sflag [#allocation3], 1
    %1215 = vsyncpa %s1214, 1
    %1216 = vsyncpa [#allocation6], 1
    %s1217 = scalar_lea.sflag [#allocation6], 1
    %1218 = vsyncpa %s1217, 1
    %1219 = vsyncpa [#allocation9], 1
    %1220 = vsyncpa [#allocation12], 1
    %1221 = vsyncpa [#allocation4], 1
    %s1222 = scalar_lea.sflag [#allocation4], 1
    %1223 = vsyncpa %s1222, 1

</llo_original>
